<compile_context>
chip_gen: v5e
topology: v5e:2x2
jax: 0.10.0
libtpu: 0.0.40
codegen_flags: <defaults>
</compile_context>

<pallas_src>
import functools

import jax
import jax.numpy as jnp
from jax.experimental import pallas as pl
from jax.experimental.pallas import tpu as pltpu

_NEG = -1e30  # pad bias / pad-row fill: softmaxes to exactly 0, stays finite in f32


def _round_up(x, m):
    return ((x + m - 1) // m) * m


def _cdiv(a, b):
    return -(-a // b)


def _softmax_rows(z):
    """Row softmax (axis=-1); the divide goes to the EUP via approximate reciprocal."""
    m = jnp.max(z, axis=-1, keepdims=True)
    e = jnp.exp(z - m)
    s = jnp.sum(e, axis=-1, keepdims=True)
    return e * pl.reciprocal(s, approx=True)


# ---------------------------------------------------------------------------
# Kernel 1: per-ROI-tile heads.  grid = (n_tiles,), ROI axis "parallel".
#   fused     = x_roi @ [W_cls | W_r1 | W_r2] + b   (one MXU matmul, 128-lane aligned segments)
#   det_score = (x_frm - x_ctx) @ W_det             (det bias cancels -> single matmul)
# Padded rows (row >= rows_valid) get det_score = -1e30 so they contribute exactly 0 to the
# downstream axis-0 softmax / reductions; no slicing is needed between the two pallas_calls.
# ---------------------------------------------------------------------------
def _roi_heads_kernel(fc7_roi_ref, fc7_ctx_ref, fc7_frm_ref,
                      w_fused_ref, b_fused_ref, w_det_ref,
                      cls_prob_ref, cls_score_ref, refine1_ref, refine2_ref, det_score_ref,
                      *, seg, tile_r, rows_valid, mask_rows):
    w_dtype = w_fused_ref.dtype
    x_roi = fc7_roi_ref[...].astype(w_dtype)
    # det head: subtract in f32 (avoids bf16 cancellation), then cast for the MXU.
    x_det = (fc7_frm_ref[...].astype(jnp.float32)
             - fc7_ctx_ref[...].astype(jnp.float32)).astype(w_dtype)

    fused = jnp.dot(x_roi, w_fused_ref[...],
                    preferred_element_type=jnp.float32) + b_fused_ref[...]
    det_score = jnp.dot(x_det, w_det_ref[...], preferred_element_type=jnp.float32)

    if mask_rows:
        row = (pl.program_id(0) * tile_r
               + jax.lax.broadcasted_iota(jnp.int32, (tile_r, seg), 0))
        det_score = jnp.where(row < rows_valid, det_score, _NEG)

    # Lane-aligned static slices (offsets are multiples of 128).
    cls_score = fused[:, 0:seg]
    r1_score = fused[:, seg:2 * seg]
    r2_score = fused[:, 2 * seg:3 * seg]

    cls_prob_ref[...] = _softmax_rows(cls_score)
    refine1_ref[...] = _softmax_rows(r1_score)
    refine2_ref[...] = _softmax_rows(r2_score)
    cls_score_ref[...] = cls_score
    det_score_ref[...] = det_score


# ---------------------------------------------------------------------------
# Kernel 2: cross-ROI (axis=0) ONLINE softmax reduction, gridded over the same R tiles.
# Resident (1, seg) accumulators: running max m, running sum l, and det_prob-weighted sums of
# cls_prob / cls_score.  det_prob itself is normalized in the wrapper from (det_score, m, l).
# ---------------------------------------------------------------------------
def _det_reduce_kernel(det_score_ref, cls_score_ref, cls_prob_ref,
                       m_ref, l_ref, dcp_ref, dcs_ref):
    i = pl.program_id(0)

    @pl.when(i == 0)
    def _():
        m_ref[...] = jnp.full(m_ref.shape, -jnp.inf, m_ref.dtype)
        l_ref[...] = jnp.zeros(l_ref.shape, l_ref.dtype)
        dcp_ref[...] = jnp.zeros(dcp_ref.shape, dcp_ref.dtype)
        dcs_ref[...] = jnp.zeros(dcs_ref.shape, dcs_ref.dtype)

    ds = det_score_ref[...]
    m_prev = m_ref[...]
    m_new = jnp.maximum(m_prev, jnp.max(ds, axis=0, keepdims=True))
    alpha = jnp.exp(m_prev - m_new)                 # 0 at i == 0 (accumulators are 0 there)
    e = jnp.exp(ds - m_new)                         # padded rows: exp(-1e30 - m) == 0
    l_ref[...] = alpha * l_ref[...] + jnp.sum(e, axis=0, keepdims=True)
    dcp_ref[...] = alpha * dcp_ref[...] + jnp.sum(cls_prob_ref[...] * e, axis=0, keepdims=True)
    dcs_ref[...] = alpha * dcs_ref[...] + jnp.sum(cls_score_ref[...] * e, axis=0, keepdims=True)
    m_ref[...] = m_new

    @pl.when(i == pl.num_programs(0) - 1)
    def _():
        inv_l = 1.0 / l_ref[...]     # exact divide on one (1, seg) vector — negligible cost
        dcp_ref[...] = dcp_ref[...] * inv_l
        dcs_ref[...] = dcs_ref[...] * inv_l


# ---------------------------------------------------------------------------
# Parameter handling
# ---------------------------------------------------------------------------
def init_params(key, fc7_channels, num_classes):
    """Matches Network.init_weights (normal(0, 0.01), zero bias). Weights stored transposed
    as (in_features, out_features)."""
    ks = jax.random.split(key, 4)

    def lin(k, out_dim, std):
        w = std * jax.random.normal(k, (fc7_channels, out_dim), dtype=jnp.float32)
        b = jnp.zeros((1, out_dim), dtype=jnp.float32)
        return w, b

    w_cls, b_cls = lin(ks[0], num_classes, 0.01)
    w_det, b_det = lin(ks[1], num_classes, 0.01)
    w_r1, b_r1 = lin(ks[2], num_classes + 1, 0.01)
    w_r2, b_r2 = lin(ks[3], num_classes + 1, 0.01)
    return {"w_cls": w_cls, "b_cls": b_cls,
            "w_det": w_det, "b_det": b_det,
            "w_r1": w_r1, "b_r1": b_r1,
            "w_r2": w_r2, "b_r2": b_r2}


def pack_params(params, num_classes, *, compute_dtype=jnp.bfloat16):
    """Fuse cls / refine_1 / refine_2 weights into one (D, 3*seg) lane-aligned block and pad the
    det weight to (D, seg).  Pad bias positions get -1e30 so padded columns softmax to 0.
    (In production, pack once and reuse across steps.)"""
    C = num_classes
    seg = _round_up(C + 1, 128)
    D = params["w_cls"].shape[0]

    w_fused = jnp.zeros((D, 3 * seg), jnp.float32)
    w_fused = w_fused.at[:, 0:C].set(params["w_cls"])
    w_fused = w_fused.at[:, seg:seg + C + 1].set(params["w_r1"])
    w_fused = w_fused.at[:, 2 * seg:2 * seg + C + 1].set(params["w_r2"])

    b_fused = jnp.full((1, 3 * seg), _NEG, jnp.float32)
    b_fused = b_fused.at[:, 0:C].set(params["b_cls"])
    b_fused = b_fused.at[:, seg:seg + C + 1].set(params["b_r1"])
    b_fused = b_fused.at[:, 2 * seg:2 * seg + C + 1].set(params["b_r2"])

    w_det = jnp.zeros((D, seg), jnp.float32)
    w_det = w_det.at[:, 0:C].set(params["w_det"])   # det bias cancels (frame - context)

    return {"w_fused": w_fused.astype(compute_dtype),
            "b_fused": b_fused,                      # bias stays f32 (added after f32 accum)
            "w_det": w_det.astype(compute_dtype),
            "seg": seg}


# ---------------------------------------------------------------------------
# Wrapper
# ---------------------------------------------------------------------------
def region_classification(fc7_roi, fc7_context, fc7_frame, params, num_classes,
                          *, compute_dtype=jnp.bfloat16, tile_r=512):
    """Pallas equivalent of Network._region_classification (TRAIN, use_context=True).
    fc7_* are streamed in the dtype they arrive in (pass bf16 upstream to halve HBM traffic)."""
    R, D = fc7_roi.shape
    C = num_classes
    f32 = jnp.float32
    packed = pack_params(params, C, compute_dtype=compute_dtype)
    seg = packed["seg"]

    in_itemsize = max(jnp.dtype(fc7_roi.dtype).itemsize,
                      jnp.dtype(fc7_context.dtype).itemsize,
                      jnp.dtype(fc7_frame.dtype).itemsize)
    w_itemsize = jnp.dtype(compute_dtype).itemsize
    sub = 16 if in_itemsize == 2 else 8          # sublane tile of the streamed dtype

    # VMEM budget: 3/4 of physical VMEM per core (v5e/v6e: 96 MiB, v7x: 48 MiB).
    phys_vmem = 64 << 20
    try:
        cap = getattr(pltpu.get_tpu_info(), "vmem_capacity_bytes", None)
        if cap:
            phys_vmem = int(cap)
    except Exception:
        pass
    vmem_budget = (phys_vmem * 3) // 4

    def vmem_est(tr, single_w):
        stream = 2 * 3 * tr * D * in_itemsize                                  # fc7 tiles (x2 buf)
        wbuf = (1 if single_w else 2) * (4 * D * seg * w_itemsize + 3 * seg * 4)  # resident weights
        outs = 2 * 5 * tr * seg * 4                                            # f32 output tiles
        return stream + wbuf + outs

    # Pick tile_r: start from requested max, shrink to fit the VMEM budget (assume worst-case
    # double-buffered weights), then balance tiles so every grid step has real work (v7x megacore).
    tr = max(sub, min(_round_up(tile_r, sub), _round_up(R, sub)))
    while tr > sub and vmem_est(tr, False) * 5 // 4 > vmem_budget:
        tr = max(sub, _round_up(tr // 2, sub))
    n_tiles = _cdiv(R, tr)
    tr = _round_up(_cdiv(R, n_tiles), sub)
    r_pad = n_tiles * tr
    mask_rows = (r_pad != R)

    def pad_rows(x):
        # No dtype cast here (cast happens on-chip); copy only if row padding is required.
        return x if not mask_rows else jnp.pad(x, ((0, r_pad - R), (0, 0)))

    x_roi, x_ctx, x_frm = pad_rows(fc7_roi), pad_rows(fc7_context), pad_rows(fc7_frame)

    grid = (n_tiles,)
    kernel1 = functools.partial(_roi_heads_kernel, seg=seg, tile_r=tr,
                                rows_valid=R, mask_rows=mask_rows)

    def build_heads_call(single_buffer_weights):
        wmode = {"pipeline_mode": pl.Buffered(1)} if single_buffer_weights else {}
        row_spec = pl.BlockSpec((tr, D), lambda i: (i, 0))
        out_row_spec = pl.BlockSpec((tr, seg), lambda i: (i, 0))
        w_fused_spec = pl.BlockSpec((D, 3 * seg), lambda i: (0, 0), **wmode)
        b_fused_spec = pl.BlockSpec((1, 3 * seg), lambda i: (0, 0), **wmode)
        w_det_spec = pl.BlockSpec((D, seg), lambda i: (0, 0), **wmode)
        return pl.pallas_call(
            kernel1,
            grid=grid,
            in_specs=[row_spec, row_spec, row_spec, w_fused_spec, b_fused_spec, w_det_spec],
            out_specs=[out_row_spec] * 5,
            out_shape=tuple(jax.ShapeDtypeStruct((r_pad, seg), f32) for _ in range(5)),
            compiler_params=pltpu.CompilerParams(
                dimension_semantics=("parallel",),       # v7x: both TensorCores share ROI tiles
                vmem_limit_bytes=int(vmem_budget)),
        )

    args1 = (x_roi, x_ctx, x_frm, packed["w_fused"], packed["b_fused"], packed["w_det"])
    try:
        outs1 = build_heads_call(True)(*args1)    # single-buffered resident weights
    except Exception:
        outs1 = build_heads_call(False)(*args1)   # fallback: default double buffering
    cls_prob_p, cls_score_p, r1_p, r2_p, det_score_p = outs1

    # --- axis-0 (over ROIs) online softmax reduction, R-tiled: VMEM stays flat for any R. ---
    slab_spec = pl.BlockSpec((tr, seg), lambda i: (i, 0))
    red_spec = pl.BlockSpec((1, seg), lambda i: (0, 0))
    m_p, l_p, det_cls_prob_p, det_cls_score_p = pl.pallas_call(
        _det_reduce_kernel,
        grid=grid,
        in_specs=[slab_spec, slab_spec, slab_spec],
        out_specs=[red_spec] * 4,
        out_shape=tuple(jax.ShapeDtypeStruct((1, seg), f32) for _ in range(4)),
        compiler_params=pltpu.CompilerParams(
            dimension_semantics=("arbitrary",),
            vmem_limit_bytes=int(vmem_budget)),
    )(det_score_p, cls_score_p, cls_prob_p)

    # Final row/column slices + trivial glue recomputed outside the kernel (XLA fuses these;
    # the det_prob normalization fuses with the column slice, so only (R, C) is written).
    cls_prob = cls_prob_p[:R, :C]
    refine_prob_1 = r1_p[:R, :C + 1]
    refine_prob_2 = r2_p[:R, :C + 1]
    det_prob = jnp.exp(det_score_p[:R, :C] - m_p[:, :C]) / l_p[:, :C]
    det_cls_prob_product = cls_prob * det_prob
    objs_p = (refine_prob_1 + refine_prob_2) * 0.5
    bbox_pred = jnp.zeros((R, C * 4), dtype=f32)    # torch.zeros(R, num_classes * 4)

    return {
        "cls_prob": cls_prob,
        "det_prob": det_prob,
        "bbox_pred": bbox_pred,
        "det_cls_prob_product": det_cls_prob_product,
        "det_cls_prob": det_cls_prob_p[0, :C],
        "det_cls_score": det_cls_score_p[0, :C],
        "refine_prob_1": refine_prob_1,
        "refine_prob_2": refine_prob_2,
        "objs_p": objs_p,
    }


# TODO(synk): _image_to_head / _head_to_tail are abstract (NotImplementedError) and
# RoIRingPool / RoIPool / RoIAlign are external CUDA ops; fc7_roi / fc7_context / fc7_frame
# are taken as kernel inputs instead.
# TODO(synk): _add_losses / get_refine_supervision is data-dependent host numpy (argmax-based
# pseudo-label mining with dynamic-size concatenations) and has no clean Pallas equivalent.


if __name__ == "__main__":
    num_rois = 20          # R (deliberately not a multiple of the tile -> exercises row masking)
    fc7_channels = 32      # D
    num_classes = 8        # C

    key = jax.random.PRNGKey(0)
    k_roi, k_ctx, k_frm, k_par = jax.random.split(key, 4)
    fc7_roi = jax.random.normal(k_roi, (num_rois, fc7_channels), dtype=jnp.float32)
    fc7_context = jax.random.normal(k_ctx, (num_rois, fc7_channels), dtype=jnp.float32)
    fc7_frame = jax.random.normal(k_frm, (num_rois, fc7_channels), dtype=jnp.float32)
    params = init_params(k_par, fc7_channels, num_classes)

    # plain-JAX f32 reference
    cls_score_ref = fc7_roi @ params["w_cls"] + params["b_cls"]
    det_score_ref = (fc7_frame - fc7_context) @ params["w_det"]     # det bias cancels exactly
    refine1_ref = fc7_roi @ params["w_r1"] + params["b_r1"]
    refine2_ref = fc7_roi @ params["w_r2"] + params["b_r2"]
    cls_prob_ref = jax.nn.softmax(cls_score_ref, axis=1)
    det_prob_ref = jax.nn.softmax(det_score_ref, axis=0)
    refine_prob_1_ref = jax.nn.softmax(refine1_ref, axis=1)
    refine_prob_2_ref = jax.nn.softmax(refine2_ref, axis=1)
    det_cls_prob_ref = jnp.sum(cls_prob_ref * det_prob_ref, axis=0)
    det_cls_score_ref = jnp.sum(cls_score_ref * det_prob_ref, axis=0)

    def check(preds, tol):
        assert jnp.allclose(preds["cls_prob"], cls_prob_ref, **tol)
        assert jnp.allclose(preds["det_prob"], det_prob_ref, **tol)
        assert jnp.allclose(preds["refine_prob_1"], refine_prob_1_ref, **tol)
        assert jnp.allclose(preds["refine_prob_2"], refine_prob_2_ref, **tol)
        assert jnp.allclose(preds["det_cls_prob"], det_cls_prob_ref, **tol)
        assert jnp.allclose(preds["det_cls_score"], det_cls_score_ref, **tol)
        assert jnp.allclose(preds["det_cls_prob_product"], cls_prob_ref * det_prob_ref, **tol)
        assert jnp.allclose(preds["objs_p"],
                            0.5 * (refine_prob_1_ref + refine_prob_2_ref), **tol)
        assert preds["bbox_pred"].shape == (num_rois, num_classes * 4)
        assert preds["refine_prob_1"].shape == (num_rois, num_classes + 1)
        assert preds["det_prob"].shape == (num_rois, num_classes)

    # Default hot path: bf16 operands, f32 MXU accumulation + f32 softmax math.
    preds = region_classification(fc7_roi, fc7_context, fc7_frame, params, num_classes)
    preds = jax.block_until_ready(preds)
    check(preds, dict(atol=5e-3, rtol=5e-3))

    # f32 path with a tiny tile -> multi-tile grid: exercises the online axis-0 softmax
    # accumulation across grid steps and the padded-row masking on the last tile.
    preds_f32 = region_classification(fc7_roi, fc7_context, fc7_frame, params, num_classes,
                                      compute_dtype=jnp.float32, tile_r=16)
    preds_f32 = jax.block_until_ready(preds_f32)
    check(preds_f32, dict(atol=2e-3, rtol=1e-3))

    print("KERNEL_OK")
</pallas_src>

<mosaic_0001>
module attributes {stable_mosaic.version = 11 : i64} {
  func.func @_roi_heads_kernel(%arg0: i32, %arg1: memref<24x32xf32, #tpu.memory_space<vmem>>, %arg2: memref<24x32xf32, #tpu.memory_space<vmem>>, %arg3: memref<24x32xf32, #tpu.memory_space<vmem>>, %arg4: memref<32x384xbf16, #tpu.memory_space<vmem>>, %arg5: memref<1x384xf32, #tpu.memory_space<vmem>>, %arg6: memref<32x128xbf16, #tpu.memory_space<vmem>>, %arg7: memref<24x128xf32, #tpu.memory_space<vmem>>, %arg8: memref<24x128xf32, #tpu.memory_space<vmem>>, %arg9: memref<24x128xf32, #tpu.memory_space<vmem>>, %arg10: memref<24x128xf32, #tpu.memory_space<vmem>>, %arg11: memref<24x128xf32, #tpu.memory_space<vmem>>) attributes {dimension_semantics = [#tpu.dimension_semantics<parallel>], iteration_bounds = array<i64: 1>, scalar_prefetch = 0 : i64, scratch_operands = 0 : i64, tpu.core_type = #tpu.core_type<tc>, window_params = [{transform_indices = @transform_0, window_bounds = array<i64: 24, 32>}, {transform_indices = @transform_1, window_bounds = array<i64: 24, 32>}, {transform_indices = @transform_2, window_bounds = array<i64: 24, 32>}, {pipeline_mode = #tpu.pipeline_mode<synchronous>, transform_indices = @transform_3, window_bounds = array<i64: 32, 384>}, {pipeline_mode = #tpu.pipeline_mode<synchronous>, transform_indices = @transform_4, window_bounds = array<i64: 1, 384>}, {pipeline_mode = #tpu.pipeline_mode<synchronous>, transform_indices = @transform_5, window_bounds = array<i64: 32, 128>}, {transform_indices = @transform_6, window_bounds = array<i64: 24, 128>}, {transform_indices = @transform_7, window_bounds = array<i64: 24, 128>}, {transform_indices = @transform_8, window_bounds = array<i64: 24, 128>}, {transform_indices = @transform_9, window_bounds = array<i64: 24, 128>}, {transform_indices = @transform_10, window_bounds = array<i64: 24, 128>}]} {
    %c0 = arith.constant 0 : index
    %c0_0 = arith.constant 0 : index
    %0 = vector.load %arg1[%c0, %c0_0] : memref<24x32xf32, #tpu.memory_space<vmem>>, vector<24x32xf32>
    %1 = arith.truncf %0 : vector<24x32xf32> to vector<24x32xbf16>
    %c0_1 = arith.constant 0 : index
    %c0_2 = arith.constant 0 : index
    %2 = vector.load %arg3[%c0_1, %c0_2] : memref<24x32xf32, #tpu.memory_space<vmem>>, vector<24x32xf32>
    %c0_3 = arith.constant 0 : index
    %c0_4 = arith.constant 0 : index
    %3 = vector.load %arg2[%c0_3, %c0_4] : memref<24x32xf32, #tpu.memory_space<vmem>>, vector<24x32xf32>
    %4 = arith.subf %2, %3 : vector<24x32xf32>
    %5 = arith.truncf %4 : vector<24x32xf32> to vector<24x32xbf16>
    %c0_5 = arith.constant 0 : index
    %c0_6 = arith.constant 0 : index
    %6 = vector.load %arg4[%c0_5, %c0_6] : memref<32x384xbf16, #tpu.memory_space<vmem>>, vector<32x384xbf16>
    %cst = arith.constant dense<0.000000e+00> : vector<24x384xf32>
    %7 = tpu.matmul %1, %6, %cst {dimension_numbers = #tpu.dot_dimension_numbers<[1], [0], [0], [1], [0, 0, 1, 1], [], []>} : vector<24x32xbf16>, vector<32x384xbf16>, vector<24x384xf32> -> vector<24x384xf32>
    %c0_7 = arith.constant 0 : index
    %c0_8 = arith.constant 0 : index
    %8 = vector.load %arg5[%c0_7, %c0_8] : memref<1x384xf32, #tpu.memory_space<vmem>>, vector<1x384xf32>
    %9 = vector.broadcast %8 : vector<1x384xf32> to vector<24x384xf32>
    %10 = arith.addf %7, %9 : vector<24x384xf32>
    %c0_9 = arith.constant 0 : index
    %c0_10 = arith.constant 0 : index
    %11 = vector.load %arg6[%c0_9, %c0_10] : memref<32x128xbf16, #tpu.memory_space<vmem>>, vector<32x128xbf16>
    %cst_11 = arith.constant dense<0.000000e+00> : vector<24x128xf32>
    %12 = tpu.matmul %5, %11, %cst_11 {dimension_numbers = #tpu.dot_dimension_numbers<[1], [0], [0], [1], [0, 0, 1, 1], [], []>} : vector<24x32xbf16>, vector<32x128xbf16>, vector<24x128xf32> -> vector<24x128xf32>
    %c24_i32 = arith.constant 24 : i32
    %13 = arith.muli %arg0, %c24_i32 : i32
    %14 = tpu.iota {dimensions = array<i32: 0>} : vector<24x128xi32>
    %15 = vector.broadcast %13 : i32 to vector<24x128xi32>
    %16 = arith.addi %15, %14 : vector<24x128xi32>
    %c20_i32 = arith.constant 20 : i32
    %17 = vector.broadcast %c20_i32 : i32 to vector<24x128xi32>
    %18 = arith.cmpi slt, %16, %17 : vector<24x128xi32>
    %cst_12 = arith.constant -1.000000e+30 : f32
    %19 = vector.broadcast %cst_12 : f32 to vector<24x128xf32>
    %20 = arith.select %18, %12, %19 : vector<24x128xi1>, vector<24x128xf32>
    %21 = vector.extract_strided_slice %10 {offsets = [0, 0], sizes = [24, 128], strides = [1, 1]} : vector<24x384xf32> to vector<24x128xf32>
    %22 = vector.extract_strided_slice %10 {offsets = [0, 128], sizes = [24, 128], strides = [1, 1]} : vector<24x384xf32> to vector<24x128xf32>
    %23 = vector.extract_strided_slice %10 {offsets = [0, 256], sizes = [24, 128], strides = [1, 1]} : vector<24x384xf32> to vector<24x128xf32>
    %cst_13 = arith.constant dense<0xFF800000> : vector<24xf32>
    %24 = vector.multi_reduction <maximumf>, %21, %cst_13 [1] : vector<24x128xf32> to vector<24xf32>
    %25 = vector.shape_cast %24 : vector<24xf32> to vector<24x1xf32>
    %26 = vector.broadcast %25 : vector<24x1xf32> to vector<24x128xf32>
    %27 = arith.subf %21, %26 : vector<24x128xf32>
    %28 = math.exp %27 : vector<24x128xf32>
    %cst_14 = arith.constant dense<0.000000e+00> : vector<24xf32>
    %29 = vector.multi_reduction <add>, %28, %cst_14 [1] : vector<24x128xf32> to vector<24xf32>
    %30 = vector.shape_cast %29 : vector<24xf32> to vector<24x1xf32>
    %31 = tpu.reciprocal %30 {approx = true} : vector<24x1xf32> -> vector<24x1xf32>
    %32 = vector.broadcast %31 : vector<24x1xf32> to vector<24x128xf32>
    %33 = arith.mulf %28, %32 : vector<24x128xf32>
    %c0_15 = arith.constant 0 : index
    %c0_16 = arith.constant 0 : index
    %34 = vector.load %arg7[%c0_15, %c0_16] : memref<24x128xf32, #tpu.memory_space<vmem>>, vector<24x128xf32>
    tpu.vector_store %arg7[%c0_15, %c0_16], %33 {strides = array<i32>} : memref<24x128xf32, #tpu.memory_space<vmem>>, vector<24x128xf32>,
    %cst_17 = arith.constant dense<0xFF800000> : vector<24xf32>
    %35 = vector.multi_reduction <maximumf>, %22, %cst_17 [1] : vector<24x128xf32> to vector<24xf32>
    %36 = vector.shape_cast %35 : vector<24xf32> to vector<24x1xf32>
    %37 = vector.broadcast %36 : vector<24x1xf32> to vector<24x128xf32>
    %38 = arith.subf %22, %37 : vector<24x128xf32>
    %39 = math.exp %38 : vector<24x128xf32>
    %cst_18 = arith.constant dense<0.000000e+00> : vector<24xf32>
    %40 = vector.multi_reduction <add>, %39, %cst_18 [1] : vector<24x128xf32> to vector<24xf32>
    %41 = vector.shape_cast %40 : vector<24xf32> to vector<24x1xf32>
    %42 = tpu.reciprocal %41 {approx = true} : vector<24x1xf32> -> vector<24x1xf32>
    %43 = vector.broadcast %42 : vector<24x1xf32> to vector<24x128xf32>
    %44 = arith.mulf %39, %43 : vector<24x128xf32>
    %c0_19 = arith.constant 0 : index
    %c0_20 = arith.constant 0 : index
    %45 = vector.load %arg9[%c0_19, %c0_20] : memref<24x128xf32, #tpu.memory_space<vmem>>, vector<24x128xf32>
    tpu.vector_store %arg9[%c0_19, %c0_20], %44 {strides = array<i32>} : memref<24x128xf32, #tpu.memory_space<vmem>>, vector<24x128xf32>,
    %cst_21 = arith.constant dense<0xFF800000> : vector<24xf32>
    %46 = vector.multi_reduction <maximumf>, %23, %cst_21 [1] : vector<24x128xf32> to vector<24xf32>
    %47 = vector.shape_cast %46 : vector<24xf32> to vector<24x1xf32>
    %48 = vector.broadcast %47 : vector<24x1xf32> to vector<24x128xf32>
    %49 = arith.subf %23, %48 : vector<24x128xf32>
    %50 = math.exp %49 : vector<24x128xf32>
    %cst_22 = arith.constant dense<0.000000e+00> : vector<24xf32>
    %51 = vector.multi_reduction <add>, %50, %cst_22 [1] : vector<24x128xf32> to vector<24xf32>
    %52 = vector.shape_cast %51 : vector<24xf32> to vector<24x1xf32>
    %53 = tpu.reciprocal %52 {approx = true} : vector<24x1xf32> -> vector<24x1xf32>
    %54 = vector.broadcast %53 : vector<24x1xf32> to vector<24x128xf32>
    %55 = arith.mulf %50, %54 : vector<24x128xf32>
    %c0_23 = arith.constant 0 : index
    %c0_24 = arith.constant 0 : index
    %56 = vector.load %arg10[%c0_23, %c0_24] : memref<24x128xf32, #tpu.memory_space<vmem>>, vector<24x128xf32>
    tpu.vector_store %arg10[%c0_23, %c0_24], %55 {strides = array<i32>} : memref<24x128xf32, #tpu.memory_space<vmem>>, vector<24x128xf32>,
    %c0_25 = arith.constant 0 : index
    %c0_26 = arith.constant 0 : index
    %57 = vector.load %arg8[%c0_25, %c0_26] : memref<24x128xf32, #tpu.memory_space<vmem>>, vector<24x128xf32>
    tpu.vector_store %arg8[%c0_25, %c0_26], %21 {strides = array<i32>} : memref<24x128xf32, #tpu.memory_space<vmem>>, vector<24x128xf32>,
    %c0_27 = arith.constant 0 : index
    %c0_28 = arith.constant 0 : index
    %58 = vector.load %arg11[%c0_27, %c0_28] : memref<24x128xf32, #tpu.memory_space<vmem>>, vector<24x128xf32>
    tpu.vector_store %arg11[%c0_27, %c0_28], %20 {strides = array<i32>} : memref<24x128xf32, #tpu.memory_space<vmem>>, vector<24x128xf32>,
    return
  }
  func.func @transform_0(%arg0: i32) -> (i32, i32) {
    %c0_i32 = arith.constant 0 : i32
    %c0_i32_0 = arith.constant 0 : i32
    return %arg0, %c0_i32 : i32, i32
  }
  func.func @transform_1(%arg0: i32) -> (i32, i32) {
    %c0_i32 = arith.constant 0 : i32
    %c0_i32_0 = arith.constant 0 : i32
    return %arg0, %c0_i32 : i32, i32
  }
  func.func @transform_2(%arg0: i32) -> (i32, i32) {
    %c0_i32 = arith.constant 0 : i32
    %c0_i32_0 = arith.constant 0 : i32
    return %arg0, %c0_i32 : i32, i32
  }
  func.func @transform_3(%arg0: i32) -> (i32, i32) {
    %c0_i32 = arith.constant 0 : i32
    %c0_i32_0 = arith.constant 0 : i32
    %c0_i32_1 = arith.constant 0 : i32
    return %c0_i32, %c0_i32_0 : i32, i32
  }
  func.func @transform_4(%arg0: i32) -> (i32, i32) {
    %c0_i32 = arith.constant 0 : i32
    %c0_i32_0 = arith.constant 0 : i32
    %c0_i32_1 = arith.constant 0 : i32
    return %c0_i32, %c0_i32_0 : i32, i32
  }
  func.func @transform_5(%arg0: i32) -> (i32, i32) {
    %c0_i32 = arith.constant 0 : i32
    %c0_i32_0 = arith.constant 0 : i32
    %c0_i32_1 = arith.constant 0 : i32
    return %c0_i32, %c0_i32_0 : i32, i32
  }
  func.func @transform_6(%arg0: i32) -> (i32, i32) {
    %c0_i32 = arith.constant 0 : i32
    %c0_i32_0 = arith.constant 0 : i32
    return %arg0, %c0_i32 : i32, i32
  }
  func.func @transform_7(%arg0: i32) -> (i32, i32) {
    %c0_i32 = arith.constant 0 : i32
    %c0_i32_0 = arith.constant 0 : i32
    return %arg0, %c0_i32 : i32, i32
  }
  func.func @transform_8(%arg0: i32) -> (i32, i32) {
    %c0_i32 = arith.constant 0 : i32
    %c0_i32_0 = arith.constant 0 : i32
    return %arg0, %c0_i32 : i32, i32
  }
  func.func @transform_9(%arg0: i32) -> (i32, i32) {
    %c0_i32 = arith.constant 0 : i32
    %c0_i32_0 = arith.constant 0 : i32
    return %arg0, %c0_i32 : i32, i32
  }
  func.func @transform_10(%arg0: i32) -> (i32, i32) {
    %c0_i32 = arith.constant 0 : i32
    %c0_i32_0 = arith.constant 0 : i32
    return %arg0, %c0_i32 : i32, i32
  }
}

module attributes {stable_mosaic.version = 11 : i64} {
  func.func @_roi_heads_kernel(%arg0: i32, %arg1: memref<24x32xf32, #tpu.memory_space<vmem>>, %arg2: memref<24x32xf32, #tpu.memory_space<vmem>>, %arg3: memref<24x32xf32, #tpu.memory_space<vmem>>, %arg4: memref<32x384xbf16, #tpu.memory_space<vmem>>, %arg5: memref<1x384xf32, #tpu.memory_space<vmem>>, %arg6: memref<32x128xbf16, #tpu.memory_space<vmem>>, %arg7: memref<24x128xf32, #tpu.memory_space<vmem>>, %arg8: memref<24x128xf32, #tpu.memory_space<vmem>>, %arg9: memref<24x128xf32, #tpu.memory_space<vmem>>, %arg10: memref<24x128xf32, #tpu.memory_space<vmem>>, %arg11: memref<24x128xf32, #tpu.memory_space<vmem>>) attributes {dimension_semantics = [#tpu.dimension_semantics<parallel>], iteration_bounds = array<i64: 1>, scalar_prefetch = 0 : i64, scratch_operands = 0 : i64, tpu.core_type = #tpu.core_type<tc>, window_params = [{transform_indices = @transform_0, window_bounds = array<i64: 24, 32>}, {transform_indices = @transform_1, window_bounds = array<i64: 24, 32>}, {transform_indices = @transform_2, window_bounds = array<i64: 24, 32>}, {pipeline_mode = #tpu.pipeline_mode<synchronous>, transform_indices = @transform_3, window_bounds = array<i64: 32, 384>}, {pipeline_mode = #tpu.pipeline_mode<synchronous>, transform_indices = @transform_4, window_bounds = array<i64: 1, 384>}, {pipeline_mode = #tpu.pipeline_mode<synchronous>, transform_indices = @transform_5, window_bounds = array<i64: 32, 128>}, {transform_indices = @transform_6, window_bounds = array<i64: 24, 128>}, {transform_indices = @transform_7, window_bounds = array<i64: 24, 128>}, {transform_indices = @transform_8, window_bounds = array<i64: 24, 128>}, {transform_indices = @transform_9, window_bounds = array<i64: 24, 128>}, {transform_indices = @transform_10, window_bounds = array<i64: 24, 128>}]} {
    %c0 = arith.constant 0 : index
    %c0_0 = arith.constant 0 : index
    %0 = vector.load %arg1[%c0, %c0_0] : memref<24x32xf32, #tpu.memory_space<vmem>>, vector<24x32xf32>
    %1 = arith.truncf %0 : vector<24x32xf32> to vector<24x32xbf16>
    %c0_1 = arith.constant 0 : index
    %c0_2 = arith.constant 0 : index
    %2 = vector.load %arg3[%c0_1, %c0_2] : memref<24x32xf32, #tpu.memory_space<vmem>>, vector<24x32xf32>
    %c0_3 = arith.constant 0 : index
    %c0_4 = arith.constant 0 : index
    %3 = vector.load %arg2[%c0_3, %c0_4] : memref<24x32xf32, #tpu.memory_space<vmem>>, vector<24x32xf32>
    %4 = arith.subf %2, %3 : vector<24x32xf32>
    %5 = arith.truncf %4 : vector<24x32xf32> to vector<24x32xbf16>
    %c0_5 = arith.constant 0 : index
    %c0_6 = arith.constant 0 : index
    %6 = vector.load %arg4[%c0_5, %c0_6] : memref<32x384xbf16, #tpu.memory_space<vmem>>, vector<32x384xbf16>
    %cst = arith.constant dense<0.000000e+00> : vector<24x384xf32>
    %7 = tpu.matmul %1, %6, %cst {dimension_numbers = #tpu.dot_dimension_numbers<[1], [0], [0], [1], [0, 0, 1, 1], [], []>} : vector<24x32xbf16>, vector<32x384xbf16>, vector<24x384xf32> -> vector<24x384xf32>
    %c0_7 = arith.constant 0 : index
    %c0_8 = arith.constant 0 : index
    %8 = vector.load %arg5[%c0_7, %c0_8] : memref<1x384xf32, #tpu.memory_space<vmem>>, vector<1x384xf32>
    %9 = vector.broadcast %8 : vector<1x384xf32> to vector<24x384xf32>
    %10 = arith.addf %7, %9 : vector<24x384xf32>
    %c0_9 = arith.constant 0 : index
    %c0_10 = arith.constant 0 : index
    %11 = vector.load %arg6[%c0_9, %c0_10] : memref<32x128xbf16, #tpu.memory_space<vmem>>, vector<32x128xbf16>
    %cst_11 = arith.constant dense<0.000000e+00> : vector<24x128xf32>
    %12 = tpu.matmul %5, %11, %cst_11 {dimension_numbers = #tpu.dot_dimension_numbers<[1], [0], [0], [1], [0, 0, 1, 1], [], []>} : vector<24x32xbf16>, vector<32x128xbf16>, vector<24x128xf32> -> vector<24x128xf32>
    %c24_i32 = arith.constant 24 : i32
    %13 = arith.muli %arg0, %c24_i32 : i32
    %14 = tpu.iota {dimensions = array<i32: 0>} : vector<24x128xi32>
    %15 = vector.broadcast %13 : i32 to vector<24x128xi32>
    %16 = arith.addi %15, %14 : vector<24x128xi32>
    %c20_i32 = arith.constant 20 : i32
    %17 = vector.broadcast %c20_i32 : i32 to vector<24x128xi32>
    %18 = arith.cmpi slt, %16, %17 : vector<24x128xi32>
    %cst_12 = arith.constant -1.000000e+30 : f32
    %19 = vector.broadcast %cst_12 : f32 to vector<24x128xf32>
    %20 = arith.select %18, %12, %19 : vector<24x128xi1>, vector<24x128xf32>
    %21 = vector.extract_strided_slice %10 {offsets = [0, 0], sizes = [24, 128], strides = [1, 1]} : vector<24x384xf32> to vector<24x128xf32>
    %22 = vector.extract_strided_slice %10 {offsets = [0, 128], sizes = [24, 128], strides = [1, 1]} : vector<24x384xf32> to vector<24x128xf32>
    %23 = vector.extract_strided_slice %10 {offsets = [0, 256], sizes = [24, 128], strides = [1, 1]} : vector<24x384xf32> to vector<24x128xf32>
    %cst_13 = arith.constant dense<0xFF800000> : vector<24xf32>
    %24 = vector.multi_reduction <maximumf>, %21, %cst_13 [1] : vector<24x128xf32> to vector<24xf32>
    %25 = vector.shape_cast %24 : vector<24xf32> to vector<24x1xf32>
    %26 = vector.broadcast %25 : vector<24x1xf32> to vector<24x128xf32>
    %27 = arith.subf %21, %26 : vector<24x128xf32>
    %28 = math.exp %27 : vector<24x128xf32>
    %cst_14 = arith.constant dense<0.000000e+00> : vector<24xf32>
    %29 = vector.multi_reduction <add>, %28, %cst_14 [1] : vector<24x128xf32> to vector<24xf32>
    %30 = vector.shape_cast %29 : vector<24xf32> to vector<24x1xf32>
    %31 = tpu.reciprocal %30 {approx = true} : vector<24x1xf32> -> vector<24x1xf32>
    %32 = vector.broadcast %31 : vector<24x1xf32> to vector<24x128xf32>
    %33 = arith.mulf %28, %32 : vector<24x128xf32>
    %c0_15 = arith.constant 0 : index
    %c0_16 = arith.constant 0 : index
    %34 = vector.load %arg7[%c0_15, %c0_16] : memref<24x128xf32, #tpu.memory_space<vmem>>, vector<24x128xf32>
    tpu.vector_store %arg7[%c0_15, %c0_16], %33 {strides = array<i32>} : memref<24x128xf32, #tpu.memory_space<vmem>>, vector<24x128xf32>,
    %cst_17 = arith.constant dense<0xFF800000> : vector<24xf32>
    %35 = vector.multi_reduction <maximumf>, %22, %cst_17 [1] : vector<24x128xf32> to vector<24xf32>
    %36 = vector.shape_cast %35 : vector<24xf32> to vector<24x1xf32>
    %37 = vector.broadcast %36 : vector<24x1xf32> to vector<24x128xf32>
    %38 = arith.subf %22, %37 : vector<24x128xf32>
    %39 = math.exp %38 : vector<24x128xf32>
    %cst_18 = arith.constant dense<0.000000e+00> : vector<24xf32>
    %40 = vector.multi_reduction <add>, %39, %cst_18 [1] : vector<24x128xf32> to vector<24xf32>
    %41 = vector.shape_cast %40 : vector<24xf32> to vector<24x1xf32>
    %42 = tpu.reciprocal %41 {approx = true} : vector<24x1xf32> -> vector<24x1xf32>
    %43 = vector.broadcast %42 : vector<24x1xf32> to vector<24x128xf32>
    %44 = arith.mulf %39, %43 : vector<24x128xf32>
    %c0_19 = arith.constant 0 : index
    %c0_20 = arith.constant 0 : index
    %45 = vector.load %arg9[%c0_19, %c0_20] : memref<24x128xf32, #tpu.memory_space<vmem>>, vector<24x128xf32>
    tpu.vector_store %arg9[%c0_19, %c0_20], %44 {strides = array<i32>} : memref<24x128xf32, #tpu.memory_space<vmem>>, vector<24x128xf32>,
    %cst_21 = arith.constant dense<0xFF800000> : vector<24xf32>
    %46 = vector.multi_reduction <maximumf>, %23, %cst_21 [1] : vector<24x128xf32> to vector<24xf32>
    %47 = vector.shape_cast %46 : vector<24xf32> to vector<24x1xf32>
    %48 = vector.broadcast %47 : vector<24x1xf32> to vector<24x128xf32>
    %49 = arith.subf %23, %48 : vector<24x128xf32>
    %50 = math.exp %49 : vector<24x128xf32>
    %cst_22 = arith.constant dense<0.000000e+00> : vector<24xf32>
    %51 = vector.multi_reduction <add>, %50, %cst_22 [1] : vector<24x128xf32> to vector<24xf32>
    %52 = vector.shape_cast %51 : vector<24xf32> to vector<24x1xf32>
    %53 = tpu.reciprocal %52 {approx = true} : vector<24x1xf32> -> vector<24x1xf32>
    %54 = vector.broadcast %53 : vector<24x1xf32> to vector<24x128xf32>
    %55 = arith.mulf %50, %54 : vector<24x128xf32>
    %c0_23 = arith.constant 0 : index
    %c0_24 = arith.constant 0 : index
    %56 = vector.load %arg10[%c0_23, %c0_24] : memref<24x128xf32, #tpu.memory_space<vmem>>, vector<24x128xf32>
    tpu.vector_store %arg10[%c0_23, %c0_24], %55 {strides = array<i32>} : memref<24x128xf32, #tpu.memory_space<vmem>>, vector<24x128xf32>,
    %c0_25 = arith.constant 0 : index
    %c0_26 = arith.constant 0 : index
    %57 = vector.load %arg8[%c0_25, %c0_26] : memref<24x128xf32, #tpu.memory_space<vmem>>, vector<24x128xf32>
    tpu.vector_store %arg8[%c0_25, %c0_26], %21 {strides = array<i32>} : memref<24x128xf32, #tpu.memory_space<vmem>>, vector<24x128xf32>,
    %c0_27 = arith.constant 0 : index
    %c0_28 = arith.constant 0 : index
    %58 = vector.load %arg11[%c0_27, %c0_28] : memref<24x128xf32, #tpu.memory_space<vmem>>, vector<24x128xf32>
    tpu.vector_store %arg11[%c0_27, %c0_28], %20 {strides = array<i32>} : memref<24x128xf32, #tpu.memory_space<vmem>>, vector<24x128xf32>,
    return
  }
  func.func @transform_0(%arg0: i32) -> (i32, i32) {
    %c0_i32 = arith.constant 0 : i32
    %c0_i32_0 = arith.constant 0 : i32
    return %arg0, %c0_i32 : i32, i32
  }
  func.func @transform_1(%arg0: i32) -> (i32, i32) {
    %c0_i32 = arith.constant 0 : i32
    %c0_i32_0 = arith.constant 0 : i32
    return %arg0, %c0_i32 : i32, i32
  }
  func.func @transform_2(%arg0: i32) -> (i32, i32) {
    %c0_i32 = arith.constant 0 : i32
    %c0_i32_0 = arith.constant 0 : i32
    return %arg0, %c0_i32 : i32, i32
  }
  func.func @transform_3(%arg0: i32) -> (i32, i32) {
    %c0_i32 = arith.constant 0 : i32
    %c0_i32_0 = arith.constant 0 : i32
    %c0_i32_1 = arith.constant 0 : i32
    return %c0_i32, %c0_i32_0 : i32, i32
  }
  func.func @transform_4(%arg0: i32) -> (i32, i32) {
    %c0_i32 = arith.constant 0 : i32
    %c0_i32_0 = arith.constant 0 : i32
    %c0_i32_1 = arith.constant 0 : i32
    return %c0_i32, %c0_i32_0 : i32, i32
  }
  func.func @transform_5(%arg0: i32) -> (i32, i32) {
    %c0_i32 = arith.constant 0 : i32
    %c0_i32_0 = arith.constant 0 : i32
    %c0_i32_1 = arith.constant 0 : i32
    return %c0_i32, %c0_i32_0 : i32, i32
  }
  func.func @transform_6(%arg0: i32) -> (i32, i32) {
    %c0_i32 = arith.constant 0 : i32
    %c0_i32_0 = arith.constant 0 : i32
    return %arg0, %c0_i32 : i32, i32
  }
  func.func @transform_7(%arg0: i32) -> (i32, i32) {
    %c0_i32 = arith.constant 0 : i32
    %c0_i32_0 = arith.constant 0 : i32
    return %arg0, %c0_i32 : i32, i32
  }
  func.func @transform_8(%arg0: i32) -> (i32, i32) {
    %c0_i32 = arith.constant 0 : i32
    %c0_i32_0 = arith.constant 0 : i32
    return %arg0, %c0_i32 : i32, i32
  }
  func.func @transform_9(%arg0: i32) -> (i32, i32) {
    %c0_i32 = arith.constant 0 : i32
    %c0_i32_0 = arith.constant 0 : i32
    return %arg0, %c0_i32 : i32, i32
  }
  func.func @transform_10(%arg0: i32) -> (i32, i32) {
    %c0_i32 = arith.constant 0 : i32
    %c0_i32_0 = arith.constant 0 : i32
    return %arg0, %c0_i32 : i32, i32
  }
}

</mosaic_0001>

<llo_original>
// kernel: tpu_custom_call.1
$region0: #{tpu_custom_call.1}
  #allocation0 [shape = 'u32[]', space=smem, size = 0x4, offset = 0x4, fixed_abs, tag = 'smem constant byte address 0x4 - core index']
  #allocation1 [shape = 'u32[72,128]{1,0:T(1,128)}', space=vmem, size = 0x9000, scoped, tag = 'internal scratch']
  %s0 = inlined_call_operand.hbm [shape: f32[24,32], index: 0, kind: input, shape index: {}]
  %s1 = inlined_call_operand.hbm [shape: f32[24,32], index: 1, kind: input, shape index: {}]
  %s2 = inlined_call_operand.hbm [shape: f32[24,32], index: 2, kind: input, shape index: {}]
  %s3 = inlined_call_operand.hbm [shape: bf16[32,384], index: 3, kind: input, shape index: {}]
  %s4 = inlined_call_operand.vmem [shape: f32[1,384], index: 4, kind: input, shape index: {}]
  %s5 = inlined_call_operand.hbm [shape: bf16[32,128], index: 5, kind: input, shape index: {}]
  %s6 = inlined_call_operand.hbm [shape: f32[24,128], index: 6, kind: output, shape index: {0}]
  %s7 = inlined_call_operand.hbm [shape: f32[24,128], index: 7, kind: output, shape index: {1}]
  %s8 = inlined_call_operand.hbm [shape: f32[24,128], index: 8, kind: output, shape index: {2}]
  %s9 = inlined_call_operand.hbm [shape: f32[24,128], index: 9, kind: output, shape index: {3}]
  %s10 = inlined_call_operand.hbm [shape: f32[24,128], index: 10, kind: output, shape index: {4}]
  %11 = xla_tuple %s6, %s7, %s8, %s9, %s10
  %s12 = sld [smem:[#allocation0]]
  $region86: #{tpu_custom_call.1} parent=0
    _
  %s14 = ssub.s32 1, %s12
  %s15 = scalar_select 0, %s14, %s12
  $region1: #{tpu_custom_call.1} parent=0
    #allocation2 [shape = 'u8[12288]{0}', space=vmem, size = 0x3000, scoped, tag = 'input window, operand 0, single buffered']
    #allocation3 [shape = 's32[1]{0}', space=sflag, size = 0x4, scoped, tag = 'scoped memory for tpu_custom_call.1']
    #allocation4 [shape = 's32[1]{0}', space=sflag, size = 0x4, scoped, tag = 'scoped memory for tpu_custom_call.1']
    #allocation5 [shape = 'u8[12288]{0}', space=vmem, size = 0x3000, scoped, tag = 'input window, operand 1, single buffered']
    #allocation6 [shape = 's32[1]{0}', space=sflag, size = 0x4, scoped, tag = 'scoped memory for tpu_custom_call.1']
    #allocation7 [shape = 'u8[12288]{0}', space=vmem, size = 0x3000, scoped, tag = 'input window, operand 2, single buffered']
    #allocation8 [shape = 'u8[24576]{0}', space=vmem, size = 0x6000, scoped, tag = 'input window, operand 3, single buffered']
    #allocation9 [shape = 's32[1]{0}', space=sflag, size = 0x4, scoped, tag = 'scoped memory for tpu_custom_call.1']
    #allocation10 [shape = 'u8[8192]{0}', space=vmem, size = 0x2000, scoped, tag = 'input window, operand 5, single buffered']
    #allocation11 [shape = 'u8[12288]{0}', space=vmem, size = 0x3000, scoped, tag = 'output window, operand 0, single buffered']
    #allocation12 [shape = 'u8[12288]{0}', space=vmem, size = 0x3000, scoped, tag = 'output window, operand 1, single buffered']
    #allocation13 [shape = 's32[1]{0}', space=sflag, size = 0x4, scoped, tag = 'scoped memory for tpu_custom_call.1']
    #allocation14 [shape = 'u8[12288]{0}', space=vmem, size = 0x3000, scoped, tag = 'output window, operand 2, single buffered']
    #allocation15 [shape = 'u8[12288]{0}', space=vmem, size = 0x3000, scoped, tag = 'output window, operand 3, single buffered']
    #allocation16 [shape = 's32[1]{0}', space=sflag, size = 0x4, scoped, tag = 'scoped memory for tpu_custom_call.1']
    #allocation17 [shape = 'u8[12288]{0}', space=vmem, size = 0x3000, scoped, tag = 'output window, operand 4, single buffered']
    %16 = vsyncpa [#allocation3], 0
    %17 = vsyncpa [#allocation6], 0
    %18 = vsyncpa [#allocation9], 0
    %19 = vsyncpa [#allocation4], 0
    %20 = vsyncpa [#allocation13], 0
    %21 = vsyncpa [#allocation16], 0
    // Predicated region
    $region2: #{tpu_custom_call.1} parent=1 // pred_check
      _
    $region3: #{tpu_custom_call.1} parent=1 // pred_check_branch
      %23 = sbr.rel (0) target = $region5
    $region4: #{tpu_custom_call.1} parent=1 // pred_region
      %25 = vsyncadd [#allocation3], 0
      %s26 = sshll.u32 %s0, 4
      %s27 = int_to_ptr.hbm [resolvable:$true] %s26
      %s28 = sshll.u32 [#allocation2], 4
      %s29 = int_to_ptr.vmem [resolvable:$true] %s28
      %34 = dma.hbm_to_vmem [thread:$0]  %s27, 384, %s29, [#allocation3], 128, 128, 8
    $region5: #{tpu_custom_call.1} parent=1 // pred_fallthru
      _
    // Predicated region
    $region6: #{tpu_custom_call.1} parent=1 // pred_check
      _
    $region7: #{tpu_custom_call.1} parent=1 // pred_check_branch
      %36 = sbr.rel (0) target = $region9
    $region8: #{tpu_custom_call.1} parent=1 // pred_region
      %38 = vsyncadd [#allocation6], 0
      %s39 = sshll.u32 %s1, 4
      %s40 = int_to_ptr.hbm [resolvable:$true] %s39
      %s41 = sshll.u32 [#allocation5], 4
      %s42 = int_to_ptr.vmem [resolvable:$true] %s41
      %47 = dma.hbm_to_vmem [thread:$0]  %s40, 384, %s42, [#allocation6], 128, 128, 8
    $region9: #{tpu_custom_call.1} parent=1 // pred_fallthru
      _
    // Predicated region
    $region10: #{tpu_custom_call.1} parent=1 // pred_check
      _
    $region11: #{tpu_custom_call.1} parent=1 // pred_check_branch
      %49 = sbr.rel (0) target = $region13
    $region12: #{tpu_custom_call.1} parent=1 // pred_region
      %51 = vsyncadd [#allocation6], 0
      %s52 = sshll.u32 %s2, 4
      %s53 = int_to_ptr.hbm [resolvable:$true] %s52
      %s54 = sshll.u32 [#allocation7], 4
      %s55 = int_to_ptr.vmem [resolvable:$true] %s54
      %60 = dma.hbm_to_vmem [thread:$0]  %s53, 384, %s55, [#allocation6], 128, 128, 8
    $region13: #{tpu_custom_call.1} parent=1 // pred_fallthru
      _
    // Predicated region
    $region14: #{tpu_custom_call.1} parent=1 // pred_check
      _
    $region15: #{tpu_custom_call.1} parent=1 // pred_check_branch
      %62 = sbr.rel (0) target = $region17
    $region16: #{tpu_custom_call.1} parent=1 // pred_region
      %64 = vsyncadd [#allocation9], 0
      %s65 = sshll.u32 %s3, 4
      %s66 = int_to_ptr.hbm [resolvable:$true] %s65
      %s67 = sshll.u32 [#allocation8], 4
      %s68 = int_to_ptr.vmem [resolvable:$true] %s67
      %73 = dma.hbm_to_vmem [thread:$0]  %s66, 768, %s68, [#allocation9], 192, 192, 12
    $region17: #{tpu_custom_call.1} parent=1 // pred_fallthru
      _
    // Predicated region
    $region18: #{tpu_custom_call.1} parent=1 // pred_check
      _
    $region19: #{tpu_custom_call.1} parent=1 // pred_check_branch
      %75 = sbr.rel (0) target = $region21
    $region20: #{tpu_custom_call.1} parent=1 // pred_region
      _
    $region21: #{tpu_custom_call.1} parent=1 // pred_fallthru
      _
    // Predicated region
    $region22: #{tpu_custom_call.1} parent=1 // pred_check
      _
    $region23: #{tpu_custom_call.1} parent=1 // pred_check_branch
      %77 = sbr.rel (0) target = $region25
    $region24: #{tpu_custom_call.1} parent=1 // pred_region
      %79 = vsyncadd [#allocation9], 0
      %s80 = sshll.u32 %s5, 4
      %s81 = int_to_ptr.hbm [resolvable:$true] %s80
      %s82 = sshll.u32 [#allocation10], 4
      %s83 = int_to_ptr.vmem [resolvable:$true] %s82
      %88 = dma.hbm_to_vmem [thread:$0]  %s81, 256, %s83, [#allocation9], 64, 64, 4
    $region25: #{tpu_custom_call.1} parent=1 // pred_fallthru
      _
    // Predicated region
    $region26: #{tpu_custom_call.1} parent=1 // pred_check
      _
    $region27: #{tpu_custom_call.1} parent=1 // pred_check_branch
      %90 = sbr.rel (0) target = $region29
    $region28: #{tpu_custom_call.1} parent=1 // pred_region
      %92 = dma.done [#allocation3], 384
    $region29: #{tpu_custom_call.1} parent=1 // pred_fallthru
      _
    // Predicated region
    $region30: #{tpu_custom_call.1} parent=1 // pred_check
      _
    $region31: #{tpu_custom_call.1} parent=1 // pred_check_branch
      %94 = sbr.rel (0) target = $region33
    $region32: #{tpu_custom_call.1} parent=1 // pred_region
      %96 = dma.done [#allocation6], 384
    $region33: #{tpu_custom_call.1} parent=1 // pred_fallthru
      _
    // Predicated region
    $region34: #{tpu_custom_call.1} parent=1 // pred_check
      _
    $region35: #{tpu_custom_call.1} parent=1 // pred_check_branch
      %98 = sbr.rel (0) target = $region37
    $region36: #{tpu_custom_call.1} parent=1 // pred_region
      %100 = dma.done [#allocation6], 384
    $region37: #{tpu_custom_call.1} parent=1 // pred_fallthru
      _
    // Predicated region
    $region38: #{tpu_custom_call.1} parent=1 // pred_check
      _
    $region39: #{tpu_custom_call.1} parent=1 // pred_check_branch
      %102 = sbr.rel (0) target = $region41
    $region40: #{tpu_custom_call.1} parent=1 // pred_region
      %104 = dma.done [#allocation9], 768
    $region41: #{tpu_custom_call.1} parent=1 // pred_fallthru
      _
    // Predicated region
    $region42: #{tpu_custom_call.1} parent=1 // pred_check
      _
    $region43: #{tpu_custom_call.1} parent=1 // pred_check_branch
      %106 = sbr.rel (0) target = $region45
    $region44: #{tpu_custom_call.1} parent=1 // pred_region
      %108 = dma.done [#allocation9], 256
    $region45: #{tpu_custom_call.1} parent=1 // pred_fallthru
      _
    %v110 = vld [vmem:[#allocation2] sm:$0xff]
    %v111 = vld [vmem:[#allocation2 + $0x8] sm:$0xff]
    %v112 = vld [vmem:[#allocation2 + $0x10] sm:$0xff]
    %v113 = vpack.c.bf16 %v111, %v110
    %v114 = vpack.c.bf16 %v112, %v112
    %v115 = vld [vmem:[#allocation7] sm:$0xff]
    %v116 = vld [vmem:[#allocation7 + $0x8] sm:$0xff]
    %v117 = vld [vmem:[#allocation7 + $0x10] sm:$0xff]
    %v118 = vld [vmem:[#allocation5] sm:$0xff]
    %v119 = vld [vmem:[#allocation5 + $0x8] sm:$0xff]
    %v120 = vld [vmem:[#allocation5 + $0x10] sm:$0xff]
    %v121 = vsub.f32 %v115, %v118
    %v122 = vsub.f32 %v116, %v119
    %v123 = vsub.f32 %v117, %v120
    %v124 = vpack.c.bf16 %v122, %v121
    %v125 = vpack.c.bf16 %v123, %v123
    %v126 = vld [vmem:[#allocation8] sm:$0xff]
    %v127 = vld [vmem:[#allocation8 + $0x8] sm:$0xf]
    %v128 = vld [vmem:[#allocation8 + $0xc] sm:$0xff]
    %v129 = vld [vmem:[#allocation8 + $0x14] sm:$0xf]
    %v130 = vld [vmem:[#allocation8 + $0x18] sm:$0xff]
    %v131 = vld [vmem:[#allocation8 + $0x20] sm:$0xf]
    %v132 = vld [vmem:[#allocation8 + $0x24] sm:$0xff]
    %v133 = vld [vmem:[#allocation8 + $0x2c] sm:$0xf]
    %v134 = vld [vmem:[%s4] sm:$0x7]
    %v136 = vperm.slane %v134, 0
    %v137 = vperm.slane %v134, 1
    %v138 = vperm.slane %v134, 2
    %v150 = vunpack.c.l.b16 %v126
    %v151 = vunpack.c.h.b16 %v126
    %v152 = vunpack.c.l.b16 %v127
    %v153 = vunpack.c.l.b16 %v128
    %v154 = vunpack.c.h.b16 %v128
    %v155 = vunpack.c.l.b16 %v129
    %v156 = vunpack.c.l.b16 %v130
    %v157 = vunpack.c.h.b16 %v130
    %v158 = vunpack.c.l.b16 %v131
    %v159 = vunpack.c.l.b16 %v132
    %v160 = vunpack.c.h.b16 %v132
    %v161 = vunpack.c.l.b16 %v133
    %v162 = vpack.c.b16 %v153, %v150
    %v163 = vpack.c.b16 %v154, %v151
    %v164 = vpack.c.b16 %v155, %v152
    %v165 = vpack.c.b16 %v159, %v156
    %v166 = vpack.c.b16 %v160, %v157
    %v167 = vpack.c.b16 %v161, %v158
    %vm174 = vcmask 261120
    %v176 = vsel %vm174, %v113, 0
    %v179 = vsel %vm174, %v114, 0
    %181 = vmatpush.bf16.msra.mxu0 0
    %182 = vmatpush.bf16.msra.mxu0 0
    %183 = vmatpush.bf16.msra.mxu0 0
    %184 = vmatpush.bf16.msra.mxu0 0
    %185 = vmatpush.bf16.msra.mxu0 0
    %186 = vmatpush.bf16.msra.mxu0 0
    %187 = vmatpush.bf16.msra.mxu0 %v165
    %188 = vmatpush.bf16.msra.mxu0 %v162
    %189 = vmatmul.bf16.gmra.mxu0 %v176
    %v190 = vpop.f32.mrf.mxu0
    %v191 = vadd.f32 %v136, %v190
    %v192 = vpop.f32.mrf.mxu0
    %v193 = vadd.f32 %v136, %v192
    %194 = vmatmul.bf16.gmra.mxu0 %v179
    %v195 = vpop.f32.mrf.mxu0
    %v196 = vadd.f32 %v136, %v195
    %v197 = vpop.f32.mrf.mxu0
    %198 = vdwg.mxu0
    %199 = vmatpush.bf16.msra.mxu0 0
    %200 = vmatpush.bf16.msra.mxu0 0
    %201 = vmatpush.bf16.msra.mxu0 0
    %202 = vmatpush.bf16.msra.mxu0 0
    %203 = vmatpush.bf16.msra.mxu0 0
    %204 = vmatpush.bf16.msra.mxu0 0
    %205 = vmatpush.bf16.msra.mxu0 %v166
    %206 = vmatpush.bf16.msra.mxu0 %v163
    %207 = vmatmul.bf16.gmra.mxu0 %v176
    %v208 = vpop.f32.mrf.mxu0
    %v209 = vadd.f32 %v137, %v208
    %v210 = vpop.f32.mrf.mxu0
    %v211 = vadd.f32 %v137, %v210
    %212 = vmatmul.bf16.gmra.mxu0 %v179
    %v213 = vpop.f32.mrf.mxu0
    %v214 = vadd.f32 %v137, %v213
    %v215 = vpop.f32.mrf.mxu0
    %216 = vdwg.mxu0
    %217 = vmatpush.bf16.msra.mxu0 0
    %218 = vmatpush.bf16.msra.mxu0 0
    %219 = vmatpush.bf16.msra.mxu0 0
    %220 = vmatpush.bf16.msra.mxu0 0
    %221 = vmatpush.bf16.msra.mxu0 0
    %222 = vmatpush.bf16.msra.mxu0 0
    %223 = vmatpush.bf16.msra.mxu0 %v167
    %224 = vmatpush.bf16.msra.mxu0 %v164
    %225 = vmatmul.bf16.gmra.mxu0 %v176
    %v226 = vpop.f32.mrf.mxu0
    %v227 = vadd.f32 %v138, %v226
    %v228 = vpop.f32.mrf.mxu0
    %v229 = vadd.f32 %v138, %v228
    %230 = vmatmul.bf16.gmra.mxu0 %v179
    %v231 = vpop.f32.mrf.mxu0
    %v232 = vadd.f32 %v138, %v231
    %v233 = vpop.f32.mrf.mxu0
    %234 = vdwg.mxu0
    %v235 = vld [vmem:[#allocation10] sm:$0xf]
    %v236 = vld [vmem:[#allocation10 + $0x4] sm:$0xf]
    %v237 = vld [vmem:[#allocation10 + $0x8] sm:$0xf]
    %v238 = vld [vmem:[#allocation10 + $0xc] sm:$0xf]
    %v243 = vunpack.c.l.b16 %v235
    %v244 = vunpack.c.l.b16 %v236
    %v245 = vunpack.c.l.b16 %v237
    %v246 = vunpack.c.l.b16 %v238
    %v247 = vpack.c.b16 %v244, %v243
    %v248 = vpack.c.b16 %v246, %v245
    %v252 = vsel %vm174, %v124, 0
    %v255 = vsel %vm174, %v125, 0
    %257 = vmatpush.bf16.msra.mxu0 0
    %258 = vmatpush.bf16.msra.mxu0 0
    %259 = vmatpush.bf16.msra.mxu0 0
    %260 = vmatpush.bf16.msra.mxu0 0
    %261 = vmatpush.bf16.msra.mxu0 0
    %262 = vmatpush.bf16.msra.mxu0 0
    %263 = vmatpush.bf16.msra.mxu0 %v248
    %264 = vmatpush.bf16.msra.mxu0 %v247
    %265 = vmatmul.bf16.gmra.mxu0 %v252
    %v266 = vpop.f32.mrf.mxu0
    %v267 = vadd.f32 0.0, %v266
    %v268 = vpop.f32.mrf.mxu0
    %v269 = vadd.f32 0.0, %v268
    %270 = vmatmul.bf16.gmra.mxu0 %v255
    %v271 = vpop.f32.mrf.mxu0
    %v272 = vadd.f32 0.0, %v271
    %v273 = vpop.f32.mrf.mxu0
    %274 = vdwg.mxu0
    %s275 = smul.u32 0, 24
    %v276 = vlaneseq
    %v277 = vshrl.u32 %v276, 7
    %v278 = vadd.s32 %v277, 8
    %v279 = vadd.s32 %v277, 16
    %v280 = vstv %s275
    %v281 = vadd.s32 %v280, %v277
    %v282 = vadd.s32 %v280, %v278
    %v283 = vadd.s32 %v280, %v279
    %vm284 = vcmp.lt.s32.totalorder %v281, 20
    %vm285 = vcmp.lt.s32.totalorder %v282, 20
    %vm286 = vcmp.lt.s32.totalorder %v283, 20
    %v287 = vsel %vm284, %v267, -1e+30
    %v288 = vsel %vm285, %v269, -1e+30
    %v289 = vsel %vm286, %v272, -1e+30
    %290 = vmax.xlane.f32.xlu0 %v191
    %v291 = vpop.xlane.xlu0 %290
    %292 = vmax.xlane.f32.xlu0 %v193
    %v293 = vpop.xlane.xlu0 %292
    %294 = vmax.xlane.f32.xlu0 %v196
    %v295 = vpop.xlane.xlu0 %294
    %v296 = vsub.f32 %v191, %v291
    %v297 = vsub.f32 %v193, %v293
    %v298 = vsub.f32 %v196, %v295
    %v299 = vmul.f32 %v296, 1.442695
    %v300 = vpow.pop %v299
    %v301 = vmul.f32 %v297, 1.442695
    %v302 = vpow.pop %v301
    %v303 = vmul.f32 %v298, 1.442695
    %v304 = vpow.pop %v303
    %305 = vadd.xlane.f32.xlu0 %v300
    %v306 = vpop.xlane.xlu0 %305
    %307 = vadd.xlane.f32.xlu0 %v302
    %v308 = vpop.xlane.xlu0 %307
    %309 = vadd.xlane.f32.xlu0 %v304
    %v310 = vpop.xlane.xlu0 %309
    %v311 = vrcp.pop %v306
    %v312 = vrcp.pop %v308
    %v313 = vrcp.pop %v310
    %v314 = vmul.f32 %v300, %v311
    %v315 = vmul.f32 %v302, %v312
    %v316 = vmul.f32 %v304, %v313
    %317 = vst [vmem:[#allocation11] sm:$0xff] %v314
    %318 = vst [vmem:[#allocation11 + $0x8] sm:$0xff] %v315
    %319 = vst [vmem:[#allocation11 + $0x10] sm:$0xff] %v316
    %320 = vmax.xlane.f32.xlu0 %v209
    %v321 = vpop.xlane.xlu0 %320
    %322 = vmax.xlane.f32.xlu0 %v211
    %v323 = vpop.xlane.xlu0 %322
    %324 = vmax.xlane.f32.xlu0 %v214
    %v325 = vpop.xlane.xlu0 %324
    %v326 = vsub.f32 %v209, %v321
    %v327 = vsub.f32 %v211, %v323
    %v328 = vsub.f32 %v214, %v325
    %v329 = vmul.f32 %v326, 1.442695
    %v330 = vpow.pop %v329
    %v331 = vmul.f32 %v327, 1.442695
    %v332 = vpow.pop %v331
    %v333 = vmul.f32 %v328, 1.442695
    %v334 = vpow.pop %v333
    %335 = vadd.xlane.f32.xlu0 %v330
    %v336 = vpop.xlane.xlu0 %335
    %337 = vadd.xlane.f32.xlu0 %v332
    %v338 = vpop.xlane.xlu0 %337
    %339 = vadd.xlane.f32.xlu0 %v334
    %v340 = vpop.xlane.xlu0 %339
    %v341 = vrcp.pop %v336
    %v342 = vrcp.pop %v338
    %v343 = vrcp.pop %v340
    %v344 = vmul.f32 %v330, %v341
    %v345 = vmul.f32 %v332, %v342
    %v346 = vmul.f32 %v334, %v343
    %347 = vst [vmem:[#allocation14] sm:$0xff] %v344
    %348 = vst [vmem:[#allocation14 + $0x8] sm:$0xff] %v345
    %349 = vst [vmem:[#allocation14 + $0x10] sm:$0xff] %v346
    %350 = vmax.xlane.f32.xlu0 %v227
    %v351 = vpop.xlane.xlu0 %350
    %352 = vmax.xlane.f32.xlu0 %v229
    %v353 = vpop.xlane.xlu0 %352
    %354 = vmax.xlane.f32.xlu0 %v232
    %v355 = vpop.xlane.xlu0 %354
    %v356 = vsub.f32 %v227, %v351
    %v357 = vsub.f32 %v229, %v353
    %v358 = vsub.f32 %v232, %v355
    %v359 = vmul.f32 %v356, 1.442695
    %v360 = vpow.pop %v359
    %v361 = vmul.f32 %v357, 1.442695
    %v362 = vpow.pop %v361
    %v363 = vmul.f32 %v358, 1.442695
    %v364 = vpow.pop %v363
    %365 = vadd.xlane.f32.xlu0 %v360
    %v366 = vpop.xlane.xlu0 %365
    %367 = vadd.xlane.f32.xlu0 %v362
    %v368 = vpop.xlane.xlu0 %367
    %369 = vadd.xlane.f32.xlu0 %v364
    %v370 = vpop.xlane.xlu0 %369
    %v371 = vrcp.pop %v366
    %v372 = vrcp.pop %v368
    %v373 = vrcp.pop %v370
    %v374 = vmul.f32 %v360, %v371
    %v375 = vmul.f32 %v362, %v372
    %v376 = vmul.f32 %v364, %v373
    %377 = vst [vmem:[#allocation15] sm:$0xff] %v374
    %378 = vst [vmem:[#allocation15 + $0x8] sm:$0xff] %v375
    %379 = vst [vmem:[#allocation15 + $0x10] sm:$0xff] %v376
    %380 = vst [vmem:[#allocation12] sm:$0xff] %v191
    %381 = vst [vmem:[#allocation12 + $0x8] sm:$0xff] %v193
    %382 = vst [vmem:[#allocation12 + $0x10] sm:$0xff] %v196
    %383 = vst [vmem:[#allocation17] sm:$0xff] %v287
    %384 = vst [vmem:[#allocation17 + $0x8] sm:$0xff] %v288
    %385 = vst [vmem:[#allocation17 + $0x10] sm:$0xff] %v289
    // Predicated region
    $region46: #{tpu_custom_call.1} parent=1 // pred_check
      _
    $region47: #{tpu_custom_call.1} parent=1 // pred_check_branch
      %387 = sbr.rel (0) target = $region49
    $region48: #{tpu_custom_call.1} parent=1 // pred_region
      %389 = vsyncadd [#allocation4], 0
      %s390 = sshll.u32 [#allocation11], 4
      %s391 = int_to_ptr.vmem [resolvable:$true] %s390
      %s392 = sshll.u32 %s6, 4
      %s393 = int_to_ptr.hbm [resolvable:$true] %s392
      %398 = dma.vmem_to_hbm [thread:$0]  %s391, 384, %s393, [#allocation4], 128, 128, 8
    $region49: #{tpu_custom_call.1} parent=1 // pred_fallthru
      _
    // Predicated region
    $region50: #{tpu_custom_call.1} parent=1 // pred_check
      _
    $region51: #{tpu_custom_call.1} parent=1 // pred_check_branch
      %400 = sbr.rel (0) target = $region53
    $region52: #{tpu_custom_call.1} parent=1 // pred_region
      %402 = vsyncadd [#allocation13], 0
      %s403 = sshll.u32 [#allocation12], 4
      %s404 = int_to_ptr.vmem [resolvable:$true] %s403
      %s405 = sshll.u32 %s7, 4
      %s406 = int_to_ptr.hbm [resolvable:$true] %s405
      %411 = dma.vmem_to_hbm [thread:$0]  %s404, 384, %s406, [#allocation13], 128, 128, 8
    $region53: #{tpu_custom_call.1} parent=1 // pred_fallthru
      _
    // Predicated region
    $region54: #{tpu_custom_call.1} parent=1 // pred_check
      _
    $region55: #{tpu_custom_call.1} parent=1 // pred_check_branch
      %413 = sbr.rel (0) target = $region57
    $region56: #{tpu_custom_call.1} parent=1 // pred_region
      %415 = vsyncadd [#allocation13], 0
      %s416 = sshll.u32 [#allocation14], 4
      %s417 = int_to_ptr.vmem [resolvable:$true] %s416
      %s418 = sshll.u32 %s8, 4
      %s419 = int_to_ptr.hbm [resolvable:$true] %s418
      %424 = dma.vmem_to_hbm [thread:$0]  %s417, 384, %s419, [#allocation13], 128, 128, 8
    $region57: #{tpu_custom_call.1} parent=1 // pred_fallthru
      _
    // Predicated region
    $region58: #{tpu_custom_call.1} parent=1 // pred_check
      _
    $region59: #{tpu_custom_call.1} parent=1 // pred_check_branch
      %426 = sbr.rel (0) target = $region61
    $region60: #{tpu_custom_call.1} parent=1 // pred_region
      %428 = vsyncadd [#allocation16], 0
      %s429 = sshll.u32 [#allocation15], 4
      %s430 = int_to_ptr.vmem [resolvable:$true] %s429
      %s431 = sshll.u32 %s9, 4
      %s432 = int_to_ptr.hbm [resolvable:$true] %s431
      %437 = dma.vmem_to_hbm [thread:$0]  %s430, 384, %s432, [#allocation16], 128, 128, 8
    $region61: #{tpu_custom_call.1} parent=1 // pred_fallthru
      _
    // Predicated region
    $region62: #{tpu_custom_call.1} parent=1 // pred_check
      _
    $region63: #{tpu_custom_call.1} parent=1 // pred_check_branch
      %439 = sbr.rel (0) target = $region65
    $region64: #{tpu_custom_call.1} parent=1 // pred_region
      %441 = vsyncadd [#allocation16], 0
      %s442 = sshll.u32 [#allocation17], 4
      %s443 = int_to_ptr.vmem [resolvable:$true] %s442
      %s444 = sshll.u32 %s10, 4
      %s445 = int_to_ptr.hbm [resolvable:$true] %s444
      %450 = dma.vmem_to_hbm [thread:$0]  %s443, 384, %s445, [#allocation16], 128, 128, 8
    $region65: #{tpu_custom_call.1} parent=1 // pred_fallthru
      _
    // Predicated region
    $region66: #{tpu_custom_call.1} parent=1 // pred_check
      _
    $region67: #{tpu_custom_call.1} parent=1 // pred_check_branch
      %452 = sbr.rel (0) target = $region69
    $region68: #{tpu_custom_call.1} parent=1 // pred_region
      %454 = dma.done [#allocation4], 384
    $region69: #{tpu_custom_call.1} parent=1 // pred_fallthru
      _
    // Predicated region
    $region70: #{tpu_custom_call.1} parent=1 // pred_check
      _
    $region71: #{tpu_custom_call.1} parent=1 // pred_check_branch
      %456 = sbr.rel (0) target = $region73
    $region72: #{tpu_custom_call.1} parent=1 // pred_region
      %458 = dma.done [#allocation13], 384
    $region73: #{tpu_custom_call.1} parent=1 // pred_fallthru
      _
    // Predicated region
    $region74: #{tpu_custom_call.1} parent=1 // pred_check
      _
    $region75: #{tpu_custom_call.1} parent=1 // pred_check_branch
      %460 = sbr.rel (0) target = $region77
    $region76: #{tpu_custom_call.1} parent=1 // pred_region
      %462 = dma.done [#allocation13], 384
    $region77: #{tpu_custom_call.1} parent=1 // pred_fallthru
      _
    // Predicated region
    $region78: #{tpu_custom_call.1} parent=1 // pred_check
      _
    $region79: #{tpu_custom_call.1} parent=1 // pred_check_branch
      %464 = sbr.rel (0) target = $region81
    $region80: #{tpu_custom_call.1} parent=1 // pred_region
      %466 = dma.done [#allocation16], 384
    $region81: #{tpu_custom_call.1} parent=1 // pred_fallthru
      _
    // Predicated region
    $region82: #{tpu_custom_call.1} parent=1 // pred_check
      _
    $region83: #{tpu_custom_call.1} parent=1 // pred_check_branch
      %468 = sbr.rel (0) target = $region85
    $region84: #{tpu_custom_call.1} parent=1 // pred_region
      %470 = dma.done [#allocation16], 384
    $region85: #{tpu_custom_call.1} parent=1 // pred_fallthru
      _
    %471 = vsyncpa [#allocation3], 1
    %472 = vsyncpa [#allocation6], 1
    %473 = vsyncpa [#allocation9], 1
    %474 = vsyncpa [#allocation4], 1
    %475 = vsyncpa [#allocation13], 1
    %476 = vsyncpa [#allocation16], 1

// kernel: tpu_custom_call.1
$region0: #{tpu_custom_call.1}
  #allocation0 [shape = 'u32[]', space=smem, size = 0x4, offset = 0x4, fixed_abs, tag = 'smem constant byte address 0x4 - core index']
  #allocation1 [shape = 'u32[72,128]{1,0:T(1,128)}', space=vmem, size = 0x9000, scoped, tag = 'internal scratch']
  %s0 = inlined_call_operand.hbm [shape: f32[24,32], index: 0, kind: input, shape index: {}]
  %s1 = inlined_call_operand.hbm [shape: f32[24,32], index: 1, kind: input, shape index: {}]
  %s2 = inlined_call_operand.hbm [shape: f32[24,32], index: 2, kind: input, shape index: {}]
  %s3 = inlined_call_operand.hbm [shape: bf16[32,384], index: 3, kind: input, shape index: {}]
  %s4 = inlined_call_operand.vmem [shape: f32[1,384], index: 4, kind: input, shape index: {}]
  %s5 = inlined_call_operand.hbm [shape: bf16[32,128], index: 5, kind: input, shape index: {}]
  %s6 = inlined_call_operand.hbm [shape: f32[24,128], index: 6, kind: output, shape index: {0}]
  %s7 = inlined_call_operand.hbm [shape: f32[24,128], index: 7, kind: output, shape index: {1}]
  %s8 = inlined_call_operand.hbm [shape: f32[24,128], index: 8, kind: output, shape index: {2}]
  %s9 = inlined_call_operand.hbm [shape: f32[24,128], index: 9, kind: output, shape index: {3}]
  %s10 = inlined_call_operand.hbm [shape: f32[24,128], index: 10, kind: output, shape index: {4}]
  %11 = xla_tuple %s6, %s7, %s8, %s9, %s10
  %s12 = sld [smem:[#allocation0]]
  $region86: #{tpu_custom_call.1} parent=0
    _
  %s14 = ssub.s32 1, %s12
  %s15 = scalar_select 0, %s14, %s12
  $region1: #{tpu_custom_call.1} parent=0
    #allocation2 [shape = 'u8[12288]{0}', space=vmem, size = 0x3000, scoped, tag = 'input window, operand 0, single buffered']
    #allocation3 [shape = 's32[1]{0}', space=sflag, size = 0x4, scoped, tag = 'scoped memory for tpu_custom_call.1']
    #allocation4 [shape = 's32[1]{0}', space=sflag, size = 0x4, scoped, tag = 'scoped memory for tpu_custom_call.1']
    #allocation5 [shape = 'u8[12288]{0}', space=vmem, size = 0x3000, scoped, tag = 'input window, operand 1, single buffered']
    #allocation6 [shape = 's32[1]{0}', space=sflag, size = 0x4, scoped, tag = 'scoped memory for tpu_custom_call.1']
    #allocation7 [shape = 'u8[12288]{0}', space=vmem, size = 0x3000, scoped, tag = 'input window, operand 2, single buffered']
    #allocation8 [shape = 'u8[24576]{0}', space=vmem, size = 0x6000, scoped, tag = 'input window, operand 3, single buffered']
    #allocation9 [shape = 's32[1]{0}', space=sflag, size = 0x4, scoped, tag = 'scoped memory for tpu_custom_call.1']
    #allocation10 [shape = 'u8[8192]{0}', space=vmem, size = 0x2000, scoped, tag = 'input window, operand 5, single buffered']
    #allocation11 [shape = 'u8[12288]{0}', space=vmem, size = 0x3000, scoped, tag = 'output window, operand 0, single buffered']
    #allocation12 [shape = 'u8[12288]{0}', space=vmem, size = 0x3000, scoped, tag = 'output window, operand 1, single buffered']
    #allocation13 [shape = 's32[1]{0}', space=sflag, size = 0x4, scoped, tag = 'scoped memory for tpu_custom_call.1']
    #allocation14 [shape = 'u8[12288]{0}', space=vmem, size = 0x3000, scoped, tag = 'output window, operand 2, single buffered']
    #allocation15 [shape = 'u8[12288]{0}', space=vmem, size = 0x3000, scoped, tag = 'output window, operand 3, single buffered']
    #allocation16 [shape = 's32[1]{0}', space=sflag, size = 0x4, scoped, tag = 'scoped memory for tpu_custom_call.1']
    #allocation17 [shape = 'u8[12288]{0}', space=vmem, size = 0x3000, scoped, tag = 'output window, operand 4, single buffered']
    %16 = vsyncpa [#allocation3], 0
    %17 = vsyncpa [#allocation6], 0
    %18 = vsyncpa [#allocation9], 0
    %19 = vsyncpa [#allocation4], 0
    %20 = vsyncpa [#allocation13], 0
    %21 = vsyncpa [#allocation16], 0
    // Predicated region
    $region2: #{tpu_custom_call.1} parent=1 // pred_check
      _
    $region3: #{tpu_custom_call.1} parent=1 // pred_check_branch
      %23 = sbr.rel (0) target = $region5
    $region4: #{tpu_custom_call.1} parent=1 // pred_region
      %25 = vsyncadd [#allocation3], 0
      %s26 = sshll.u32 %s0, 4
      %s27 = int_to_ptr.hbm [resolvable:$true] %s26
      %s28 = sshll.u32 [#allocation2], 4
      %s29 = int_to_ptr.vmem [resolvable:$true] %s28
      %34 = dma.hbm_to_vmem [thread:$0]  %s27, 384, %s29, [#allocation3], 128, 128, 8
    $region5: #{tpu_custom_call.1} parent=1 // pred_fallthru
      _
    // Predicated region
    $region6: #{tpu_custom_call.1} parent=1 // pred_check
      _
    $region7: #{tpu_custom_call.1} parent=1 // pred_check_branch
      %36 = sbr.rel (0) target = $region9
    $region8: #{tpu_custom_call.1} parent=1 // pred_region
      %38 = vsyncadd [#allocation6], 0
      %s39 = sshll.u32 %s1, 4
      %s40 = int_to_ptr.hbm [resolvable:$true] %s39
      %s41 = sshll.u32 [#allocation5], 4
      %s42 = int_to_ptr.vmem [resolvable:$true] %s41
      %47 = dma.hbm_to_vmem [thread:$0]  %s40, 384, %s42, [#allocation6], 128, 128, 8
    $region9: #{tpu_custom_call.1} parent=1 // pred_fallthru
      _
    // Predicated region
    $region10: #{tpu_custom_call.1} parent=1 // pred_check
      _
    $region11: #{tpu_custom_call.1} parent=1 // pred_check_branch
      %49 = sbr.rel (0) target = $region13
    $region12: #{tpu_custom_call.1} parent=1 // pred_region
      %51 = vsyncadd [#allocation6], 0
      %s52 = sshll.u32 %s2, 4
      %s53 = int_to_ptr.hbm [resolvable:$true] %s52
      %s54 = sshll.u32 [#allocation7], 4
      %s55 = int_to_ptr.vmem [resolvable:$true] %s54
      %60 = dma.hbm_to_vmem [thread:$0]  %s53, 384, %s55, [#allocation6], 128, 128, 8
    $region13: #{tpu_custom_call.1} parent=1 // pred_fallthru
      _
    // Predicated region
    $region14: #{tpu_custom_call.1} parent=1 // pred_check
      _
    $region15: #{tpu_custom_call.1} parent=1 // pred_check_branch
      %62 = sbr.rel (0) target = $region17
    $region16: #{tpu_custom_call.1} parent=1 // pred_region
      %64 = vsyncadd [#allocation9], 0
      %s65 = sshll.u32 %s3, 4
      %s66 = int_to_ptr.hbm [resolvable:$true] %s65
      %s67 = sshll.u32 [#allocation8], 4
      %s68 = int_to_ptr.vmem [resolvable:$true] %s67
      %73 = dma.hbm_to_vmem [thread:$0]  %s66, 768, %s68, [#allocation9], 192, 192, 12
    $region17: #{tpu_custom_call.1} parent=1 // pred_fallthru
      _
    // Predicated region
    $region18: #{tpu_custom_call.1} parent=1 // pred_check
      _
    $region19: #{tpu_custom_call.1} parent=1 // pred_check_branch
      %75 = sbr.rel (0) target = $region21
    $region20: #{tpu_custom_call.1} parent=1 // pred_region
      _
    $region21: #{tpu_custom_call.1} parent=1 // pred_fallthru
      _
    // Predicated region
    $region22: #{tpu_custom_call.1} parent=1 // pred_check
      _
    $region23: #{tpu_custom_call.1} parent=1 // pred_check_branch
      %77 = sbr.rel (0) target = $region25
    $region24: #{tpu_custom_call.1} parent=1 // pred_region
      %79 = vsyncadd [#allocation9], 0
      %s80 = sshll.u32 %s5, 4
      %s81 = int_to_ptr.hbm [resolvable:$true] %s80
      %s82 = sshll.u32 [#allocation10], 4
      %s83 = int_to_ptr.vmem [resolvable:$true] %s82
      %88 = dma.hbm_to_vmem [thread:$0]  %s81, 256, %s83, [#allocation9], 64, 64, 4
    $region25: #{tpu_custom_call.1} parent=1 // pred_fallthru
      _
    // Predicated region
    $region26: #{tpu_custom_call.1} parent=1 // pred_check
      _
    $region27: #{tpu_custom_call.1} parent=1 // pred_check_branch
      %90 = sbr.rel (0) target = $region29
    $region28: #{tpu_custom_call.1} parent=1 // pred_region
      %92 = dma.done [#allocation3], 384
    $region29: #{tpu_custom_call.1} parent=1 // pred_fallthru
      _
    // Predicated region
    $region30: #{tpu_custom_call.1} parent=1 // pred_check
      _
    $region31: #{tpu_custom_call.1} parent=1 // pred_check_branch
      %94 = sbr.rel (0) target = $region33
    $region32: #{tpu_custom_call.1} parent=1 // pred_region
      %96 = dma.done [#allocation6], 384
    $region33: #{tpu_custom_call.1} parent=1 // pred_fallthru
      _
    // Predicated region
    $region34: #{tpu_custom_call.1} parent=1 // pred_check
      _
    $region35: #{tpu_custom_call.1} parent=1 // pred_check_branch
      %98 = sbr.rel (0) target = $region37
    $region36: #{tpu_custom_call.1} parent=1 // pred_region
      %100 = dma.done [#allocation6], 384
    $region37: #{tpu_custom_call.1} parent=1 // pred_fallthru
      _
    // Predicated region
    $region38: #{tpu_custom_call.1} parent=1 // pred_check
      _
    $region39: #{tpu_custom_call.1} parent=1 // pred_check_branch
      %102 = sbr.rel (0) target = $region41
    $region40: #{tpu_custom_call.1} parent=1 // pred_region
      %104 = dma.done [#allocation9], 768
    $region41: #{tpu_custom_call.1} parent=1 // pred_fallthru
      _
    // Predicated region
    $region42: #{tpu_custom_call.1} parent=1 // pred_check
      _
    $region43: #{tpu_custom_call.1} parent=1 // pred_check_branch
      %106 = sbr.rel (0) target = $region45
    $region44: #{tpu_custom_call.1} parent=1 // pred_region
      %108 = dma.done [#allocation9], 256
    $region45: #{tpu_custom_call.1} parent=1 // pred_fallthru
      _
    %v110 = vld [vmem:[#allocation2] sm:$0xff]
    %v111 = vld [vmem:[#allocation2 + $0x8] sm:$0xff]
    %v112 = vld [vmem:[#allocation2 + $0x10] sm:$0xff]
    %v113 = vpack.c.bf16 %v111, %v110
    %v114 = vpack.c.bf16 %v112, %v112
    %v115 = vld [vmem:[#allocation7] sm:$0xff]
    %v116 = vld [vmem:[#allocation7 + $0x8] sm:$0xff]
    %v117 = vld [vmem:[#allocation7 + $0x10] sm:$0xff]
    %v118 = vld [vmem:[#allocation5] sm:$0xff]
    %v119 = vld [vmem:[#allocation5 + $0x8] sm:$0xff]
    %v120 = vld [vmem:[#allocation5 + $0x10] sm:$0xff]
    %v121 = vsub.f32 %v115, %v118
    %v122 = vsub.f32 %v116, %v119
    %v123 = vsub.f32 %v117, %v120
    %v124 = vpack.c.bf16 %v122, %v121
    %v125 = vpack.c.bf16 %v123, %v123
    %v126 = vld [vmem:[#allocation8] sm:$0xff]
    %v127 = vld [vmem:[#allocation8 + $0x8] sm:$0xf]
    %v128 = vld [vmem:[#allocation8 + $0xc] sm:$0xff]
    %v129 = vld [vmem:[#allocation8 + $0x14] sm:$0xf]
    %v130 = vld [vmem:[#allocation8 + $0x18] sm:$0xff]
    %v131 = vld [vmem:[#allocation8 + $0x20] sm:$0xf]
    %v132 = vld [vmem:[#allocation8 + $0x24] sm:$0xff]
    %v133 = vld [vmem:[#allocation8 + $0x2c] sm:$0xf]
    %v134 = vld [vmem:[%s4] sm:$0x7]
    %v136 = vperm.slane %v134, 0
    %v137 = vperm.slane %v134, 1
    %v138 = vperm.slane %v134, 2
    %v150 = vunpack.c.l.b16 %v126
    %v151 = vunpack.c.h.b16 %v126
    %v152 = vunpack.c.l.b16 %v127
    %v153 = vunpack.c.l.b16 %v128
    %v154 = vunpack.c.h.b16 %v128
    %v155 = vunpack.c.l.b16 %v129
    %v156 = vunpack.c.l.b16 %v130
    %v157 = vunpack.c.h.b16 %v130
    %v158 = vunpack.c.l.b16 %v131
    %v159 = vunpack.c.l.b16 %v132
    %v160 = vunpack.c.h.b16 %v132
    %v161 = vunpack.c.l.b16 %v133
    %v162 = vpack.c.b16 %v153, %v150
    %v163 = vpack.c.b16 %v154, %v151
    %v164 = vpack.c.b16 %v155, %v152
    %v165 = vpack.c.b16 %v159, %v156
    %v166 = vpack.c.b16 %v160, %v157
    %v167 = vpack.c.b16 %v161, %v158
    %vm174 = vcmask 261120
    %v176 = vsel %vm174, %v113, 0
    %v179 = vsel %vm174, %v114, 0
    %181 = vmatpush.bf16.msra.mxu0 0
    %182 = vmatpush.bf16.msra.mxu0 0
    %183 = vmatpush.bf16.msra.mxu0 0
    %184 = vmatpush.bf16.msra.mxu0 0
    %185 = vmatpush.bf16.msra.mxu0 0
    %186 = vmatpush.bf16.msra.mxu0 0
    %187 = vmatpush.bf16.msra.mxu0 %v165
    %188 = vmatpush.bf16.msra.mxu0 %v162
    %189 = vmatmul.bf16.gmra.mxu0 %v176
    %v190 = vpop.f32.mrf.mxu0
    %v191 = vadd.f32 %v136, %v190
    %v192 = vpop.f32.mrf.mxu0
    %v193 = vadd.f32 %v136, %v192
    %194 = vmatmul.bf16.gmra.mxu0 %v179
    %v195 = vpop.f32.mrf.mxu0
    %v196 = vadd.f32 %v136, %v195
    %v197 = vpop.f32.mrf.mxu0
    %198 = vdwg.mxu0
    %199 = vmatpush.bf16.msra.mxu0 0
    %200 = vmatpush.bf16.msra.mxu0 0
    %201 = vmatpush.bf16.msra.mxu0 0
    %202 = vmatpush.bf16.msra.mxu0 0
    %203 = vmatpush.bf16.msra.mxu0 0
    %204 = vmatpush.bf16.msra.mxu0 0
    %205 = vmatpush.bf16.msra.mxu0 %v166
    %206 = vmatpush.bf16.msra.mxu0 %v163
    %207 = vmatmul.bf16.gmra.mxu0 %v176
    %v208 = vpop.f32.mrf.mxu0
    %v209 = vadd.f32 %v137, %v208
    %v210 = vpop.f32.mrf.mxu0
    %v211 = vadd.f32 %v137, %v210
    %212 = vmatmul.bf16.gmra.mxu0 %v179
    %v213 = vpop.f32.mrf.mxu0
    %v214 = vadd.f32 %v137, %v213
    %v215 = vpop.f32.mrf.mxu0
    %216 = vdwg.mxu0
    %217 = vmatpush.bf16.msra.mxu0 0
    %218 = vmatpush.bf16.msra.mxu0 0
    %219 = vmatpush.bf16.msra.mxu0 0
    %220 = vmatpush.bf16.msra.mxu0 0
    %221 = vmatpush.bf16.msra.mxu0 0
    %222 = vmatpush.bf16.msra.mxu0 0
    %223 = vmatpush.bf16.msra.mxu0 %v167
    %224 = vmatpush.bf16.msra.mxu0 %v164
    %225 = vmatmul.bf16.gmra.mxu0 %v176
    %v226 = vpop.f32.mrf.mxu0
    %v227 = vadd.f32 %v138, %v226
    %v228 = vpop.f32.mrf.mxu0
    %v229 = vadd.f32 %v138, %v228
    %230 = vmatmul.bf16.gmra.mxu0 %v179
    %v231 = vpop.f32.mrf.mxu0
    %v232 = vadd.f32 %v138, %v231
    %v233 = vpop.f32.mrf.mxu0
    %234 = vdwg.mxu0
    %v235 = vld [vmem:[#allocation10] sm:$0xf]
    %v236 = vld [vmem:[#allocation10 + $0x4] sm:$0xf]
    %v237 = vld [vmem:[#allocation10 + $0x8] sm:$0xf]
    %v238 = vld [vmem:[#allocation10 + $0xc] sm:$0xf]
    %v243 = vunpack.c.l.b16 %v235
    %v244 = vunpack.c.l.b16 %v236
    %v245 = vunpack.c.l.b16 %v237
    %v246 = vunpack.c.l.b16 %v238
    %v247 = vpack.c.b16 %v244, %v243
    %v248 = vpack.c.b16 %v246, %v245
    %v252 = vsel %vm174, %v124, 0
    %v255 = vsel %vm174, %v125, 0
    %257 = vmatpush.bf16.msra.mxu0 0
    %258 = vmatpush.bf16.msra.mxu0 0
    %259 = vmatpush.bf16.msra.mxu0 0
    %260 = vmatpush.bf16.msra.mxu0 0
    %261 = vmatpush.bf16.msra.mxu0 0
    %262 = vmatpush.bf16.msra.mxu0 0
    %263 = vmatpush.bf16.msra.mxu0 %v248
    %264 = vmatpush.bf16.msra.mxu0 %v247
    %265 = vmatmul.bf16.gmra.mxu0 %v252
    %v266 = vpop.f32.mrf.mxu0
    %v267 = vadd.f32 0.0, %v266
    %v268 = vpop.f32.mrf.mxu0
    %v269 = vadd.f32 0.0, %v268
    %270 = vmatmul.bf16.gmra.mxu0 %v255
    %v271 = vpop.f32.mrf.mxu0
    %v272 = vadd.f32 0.0, %v271
    %v273 = vpop.f32.mrf.mxu0
    %274 = vdwg.mxu0
    %s275 = smul.u32 0, 24
    %v276 = vlaneseq
    %v277 = vshrl.u32 %v276, 7
    %v278 = vadd.s32 %v277, 8
    %v279 = vadd.s32 %v277, 16
    %v280 = vstv %s275
    %v281 = vadd.s32 %v280, %v277
    %v282 = vadd.s32 %v280, %v278
    %v283 = vadd.s32 %v280, %v279
    %vm284 = vcmp.lt.s32.totalorder %v281, 20
    %vm285 = vcmp.lt.s32.totalorder %v282, 20
    %vm286 = vcmp.lt.s32.totalorder %v283, 20
    %v287 = vsel %vm284, %v267, -1e+30
    %v288 = vsel %vm285, %v269, -1e+30
    %v289 = vsel %vm286, %v272, -1e+30
    %290 = vmax.xlane.f32.xlu0 %v191
    %v291 = vpop.xlane.xlu0 %290
    %292 = vmax.xlane.f32.xlu0 %v193
    %v293 = vpop.xlane.xlu0 %292
    %294 = vmax.xlane.f32.xlu0 %v196
    %v295 = vpop.xlane.xlu0 %294
    %v296 = vsub.f32 %v191, %v291
    %v297 = vsub.f32 %v193, %v293
    %v298 = vsub.f32 %v196, %v295
    %v299 = vmul.f32 %v296, 1.442695
    %v300 = vpow.pop %v299
    %v301 = vmul.f32 %v297, 1.442695
    %v302 = vpow.pop %v301
    %v303 = vmul.f32 %v298, 1.442695
    %v304 = vpow.pop %v303
    %305 = vadd.xlane.f32.xlu0 %v300
    %v306 = vpop.xlane.xlu0 %305
    %307 = vadd.xlane.f32.xlu0 %v302
    %v308 = vpop.xlane.xlu0 %307
    %309 = vadd.xlane.f32.xlu0 %v304
    %v310 = vpop.xlane.xlu0 %309
    %v311 = vrcp.pop %v306
    %v312 = vrcp.pop %v308
    %v313 = vrcp.pop %v310
    %v314 = vmul.f32 %v300, %v311
    %v315 = vmul.f32 %v302, %v312
    %v316 = vmul.f32 %v304, %v313
    %317 = vst [vmem:[#allocation11] sm:$0xff] %v314
    %318 = vst [vmem:[#allocation11 + $0x8] sm:$0xff] %v315
    %319 = vst [vmem:[#allocation11 + $0x10] sm:$0xff] %v316
    %320 = vmax.xlane.f32.xlu0 %v209
    %v321 = vpop.xlane.xlu0 %320
    %322 = vmax.xlane.f32.xlu0 %v211
    %v323 = vpop.xlane.xlu0 %322
    %324 = vmax.xlane.f32.xlu0 %v214
    %v325 = vpop.xlane.xlu0 %324
    %v326 = vsub.f32 %v209, %v321
    %v327 = vsub.f32 %v211, %v323
    %v328 = vsub.f32 %v214, %v325
    %v329 = vmul.f32 %v326, 1.442695
    %v330 = vpow.pop %v329
    %v331 = vmul.f32 %v327, 1.442695
    %v332 = vpow.pop %v331
    %v333 = vmul.f32 %v328, 1.442695
    %v334 = vpow.pop %v333
    %335 = vadd.xlane.f32.xlu0 %v330
    %v336 = vpop.xlane.xlu0 %335
    %337 = vadd.xlane.f32.xlu0 %v332
    %v338 = vpop.xlane.xlu0 %337
    %339 = vadd.xlane.f32.xlu0 %v334
    %v340 = vpop.xlane.xlu0 %339
    %v341 = vrcp.pop %v336
    %v342 = vrcp.pop %v338
    %v343 = vrcp.pop %v340
    %v344 = vmul.f32 %v330, %v341
    %v345 = vmul.f32 %v332, %v342
    %v346 = vmul.f32 %v334, %v343
    %347 = vst [vmem:[#allocation14] sm:$0xff] %v344
    %348 = vst [vmem:[#allocation14 + $0x8] sm:$0xff] %v345
    %349 = vst [vmem:[#allocation14 + $0x10] sm:$0xff] %v346
    %350 = vmax.xlane.f32.xlu0 %v227
    %v351 = vpop.xlane.xlu0 %350
    %352 = vmax.xlane.f32.xlu0 %v229
    %v353 = vpop.xlane.xlu0 %352
    %354 = vmax.xlane.f32.xlu0 %v232
    %v355 = vpop.xlane.xlu0 %354
    %v356 = vsub.f32 %v227, %v351
    %v357 = vsub.f32 %v229, %v353
    %v358 = vsub.f32 %v232, %v355
    %v359 = vmul.f32 %v356, 1.442695
    %v360 = vpow.pop %v359
    %v361 = vmul.f32 %v357, 1.442695
    %v362 = vpow.pop %v361
    %v363 = vmul.f32 %v358, 1.442695
    %v364 = vpow.pop %v363
    %365 = vadd.xlane.f32.xlu0 %v360
    %v366 = vpop.xlane.xlu0 %365
    %367 = vadd.xlane.f32.xlu0 %v362
    %v368 = vpop.xlane.xlu0 %367
    %369 = vadd.xlane.f32.xlu0 %v364
    %v370 = vpop.xlane.xlu0 %369
    %v371 = vrcp.pop %v366
    %v372 = vrcp.pop %v368
    %v373 = vrcp.pop %v370
    %v374 = vmul.f32 %v360, %v371
    %v375 = vmul.f32 %v362, %v372
    %v376 = vmul.f32 %v364, %v373
    %377 = vst [vmem:[#allocation15] sm:$0xff] %v374
    %378 = vst [vmem:[#allocation15 + $0x8] sm:$0xff] %v375
    %379 = vst [vmem:[#allocation15 + $0x10] sm:$0xff] %v376
    %380 = vst [vmem:[#allocation12] sm:$0xff] %v191
    %381 = vst [vmem:[#allocation12 + $0x8] sm:$0xff] %v193
    %382 = vst [vmem:[#allocation12 + $0x10] sm:$0xff] %v196
    %383 = vst [vmem:[#allocation17] sm:$0xff] %v287
    %384 = vst [vmem:[#allocation17 + $0x8] sm:$0xff] %v288
    %385 = vst [vmem:[#allocation17 + $0x10] sm:$0xff] %v289
    // Predicated region
    $region46: #{tpu_custom_call.1} parent=1 // pred_check
      _
    $region47: #{tpu_custom_call.1} parent=1 // pred_check_branch
      %387 = sbr.rel (0) target = $region49
    $region48: #{tpu_custom_call.1} parent=1 // pred_region
      %389 = vsyncadd [#allocation4], 0
      %s390 = sshll.u32 [#allocation11], 4
      %s391 = int_to_ptr.vmem [resolvable:$true] %s390
      %s392 = sshll.u32 %s6, 4
      %s393 = int_to_ptr.hbm [resolvable:$true] %s392
      %398 = dma.vmem_to_hbm [thread:$0]  %s391, 384, %s393, [#allocation4], 128, 128, 8
    $region49: #{tpu_custom_call.1} parent=1 // pred_fallthru
      _
    // Predicated region
    $region50: #{tpu_custom_call.1} parent=1 // pred_check
      _
    $region51: #{tpu_custom_call.1} parent=1 // pred_check_branch
      %400 = sbr.rel (0) target = $region53
    $region52: #{tpu_custom_call.1} parent=1 // pred_region
      %402 = vsyncadd [#allocation13], 0
      %s403 = sshll.u32 [#allocation12], 4
      %s404 = int_to_ptr.vmem [resolvable:$true] %s403
      %s405 = sshll.u32 %s7, 4
      %s406 = int_to_ptr.hbm [resolvable:$true] %s405
      %411 = dma.vmem_to_hbm [thread:$0]  %s404, 384, %s406, [#allocation13], 128, 128, 8
    $region53: #{tpu_custom_call.1} parent=1 // pred_fallthru
      _
    // Predicated region
    $region54: #{tpu_custom_call.1} parent=1 // pred_check
      _
    $region55: #{tpu_custom_call.1} parent=1 // pred_check_branch
      %413 = sbr.rel (0) target = $region57
    $region56: #{tpu_custom_call.1} parent=1 // pred_region
      %415 = vsyncadd [#allocation13], 0
      %s416 = sshll.u32 [#allocation14], 4
      %s417 = int_to_ptr.vmem [resolvable:$true] %s416
      %s418 = sshll.u32 %s8, 4
      %s419 = int_to_ptr.hbm [resolvable:$true] %s418
      %424 = dma.vmem_to_hbm [thread:$0]  %s417, 384, %s419, [#allocation13], 128, 128, 8
    $region57: #{tpu_custom_call.1} parent=1 // pred_fallthru
      _
    // Predicated region
    $region58: #{tpu_custom_call.1} parent=1 // pred_check
      _
    $region59: #{tpu_custom_call.1} parent=1 // pred_check_branch
      %426 = sbr.rel (0) target = $region61
    $region60: #{tpu_custom_call.1} parent=1 // pred_region
      %428 = vsyncadd [#allocation16], 0
      %s429 = sshll.u32 [#allocation15], 4
      %s430 = int_to_ptr.vmem [resolvable:$true] %s429
      %s431 = sshll.u32 %s9, 4
      %s432 = int_to_ptr.hbm [resolvable:$true] %s431
      %437 = dma.vmem_to_hbm [thread:$0]  %s430, 384, %s432, [#allocation16], 128, 128, 8
    $region61: #{tpu_custom_call.1} parent=1 // pred_fallthru
      _
    // Predicated region
    $region62: #{tpu_custom_call.1} parent=1 // pred_check
      _
    $region63: #{tpu_custom_call.1} parent=1 // pred_check_branch
      %439 = sbr.rel (0) target = $region65
    $region64: #{tpu_custom_call.1} parent=1 // pred_region
      %441 = vsyncadd [#allocation16], 0
      %s442 = sshll.u32 [#allocation17], 4
      %s443 = int_to_ptr.vmem [resolvable:$true] %s442
      %s444 = sshll.u32 %s10, 4
      %s445 = int_to_ptr.hbm [resolvable:$true] %s444
      %450 = dma.vmem_to_hbm [thread:$0]  %s443, 384, %s445, [#allocation16], 128, 128, 8
    $region65: #{tpu_custom_call.1} parent=1 // pred_fallthru
      _
    // Predicated region
    $region66: #{tpu_custom_call.1} parent=1 // pred_check
      _
    $region67: #{tpu_custom_call.1} parent=1 // pred_check_branch
      %452 = sbr.rel (0) target = $region69
    $region68: #{tpu_custom_call.1} parent=1 // pred_region
      %454 = dma.done [#allocation4], 384
    $region69: #{tpu_custom_call.1} parent=1 // pred_fallthru
      _
    // Predicated region
    $region70: #{tpu_custom_call.1} parent=1 // pred_check
      _
    $region71: #{tpu_custom_call.1} parent=1 // pred_check_branch
      %456 = sbr.rel (0) target = $region73
    $region72: #{tpu_custom_call.1} parent=1 // pred_region
      %458 = dma.done [#allocation13], 384
    $region73: #{tpu_custom_call.1} parent=1 // pred_fallthru
      _
    // Predicated region
    $region74: #{tpu_custom_call.1} parent=1 // pred_check
      _
    $region75: #{tpu_custom_call.1} parent=1 // pred_check_branch
      %460 = sbr.rel (0) target = $region77
    $region76: #{tpu_custom_call.1} parent=1 // pred_region
      %462 = dma.done [#allocation13], 384
    $region77: #{tpu_custom_call.1} parent=1 // pred_fallthru
      _
    // Predicated region
    $region78: #{tpu_custom_call.1} parent=1 // pred_check
      _
    $region79: #{tpu_custom_call.1} parent=1 // pred_check_branch
      %464 = sbr.rel (0) target = $region81
    $region80: #{tpu_custom_call.1} parent=1 // pred_region
      %466 = dma.done [#allocation16], 384
    $region81: #{tpu_custom_call.1} parent=1 // pred_fallthru
      _
    // Predicated region
    $region82: #{tpu_custom_call.1} parent=1 // pred_check
      _
    $region83: #{tpu_custom_call.1} parent=1 // pred_check_branch
      %468 = sbr.rel (0) target = $region85
    $region84: #{tpu_custom_call.1} parent=1 // pred_region
      %470 = dma.done [#allocation16], 384
    $region85: #{tpu_custom_call.1} parent=1 // pred_fallthru
      _
    %471 = vsyncpa [#allocation3], 1
    %472 = vsyncpa [#allocation6], 1
    %473 = vsyncpa [#allocation9], 1
    %474 = vsyncpa [#allocation4], 1
    %475 = vsyncpa [#allocation13], 1
    %476 = vsyncpa [#allocation16], 1

</llo_original>
